<compile_context>
chip_gen: v7x
topology: tpu7x:2x2x1
jax: 0.10.0
libtpu: 0.0.40
codegen_flags: <defaults>
</compile_context>

<pallas_src>
import functools

import jax
import jax.numpy as jnp
from jax import lax
from jax.experimental import pallas as pl
from jax.experimental.pallas import tpu as pltpu


def _elu_plus_one(x):
    # F.elu(x) + 1 ; exp clamped so the unselected branch never evaluates exp(large +x).
    return jnp.where(x > 0, x + 1.0, jnp.exp(jnp.minimum(x, 0.0)))


def _kv_state_kernel(
    k_in_ref, v_in_ref, wk_ref, bk_ref, wv_ref, bv_ref, wo_ref,
    ksum_ref, m_ref,
    ksum_acc, kv_acc,
    *, num_heads, head_dim, heads_per_group, t_tile, valid_len,
):
    """Phase 1: accumulate k_sum and the out-proj-folded kv state over T tiles."""
    t = pl.program_id(1)

    @pl.when(t == 0)
    def _init():
        ksum_acc[...] = jnp.zeros_like(ksum_acc)
        kv_acc[...] = jnp.zeros_like(kv_acc)

    xk = k_in_ref[0]                    # (Tt, E) bf16 (cast on host)
    xv = v_in_ref[0]                    # (Tt, E) bf16

    # Projections: pre-transposed (in, out) bf16 weights, f32 accumulation, no .T.
    k = jnp.dot(xk, wk_ref[...], preferred_element_type=jnp.float32) + bk_ref[...]
    v = jnp.dot(xv, wv_ref[...], preferred_element_type=jnp.float32) + bv_ref[...]
    k = _elu_plus_one(k)                # (Tt, E) f32

    if valid_len is not None:
        # T was padded to a tile multiple: mask pad rows out of the accumulation.
        row = t * t_tile + lax.broadcasted_iota(jnp.int32, k.shape, 0)
        k = jnp.where(row < valid_len, k, 0.0)

    ksum_acc[...] += jnp.sum(k, axis=0, keepdims=True)          # (1, E)

    kb = k.astype(jnp.bfloat16)
    vb = v.astype(jnp.bfloat16)
    D = head_dim
    # Head-grouped kv matmuls: each dot_general has M = N = g*D ~= mxu_width so the MXU
    # tile is filled even when head_dim is small; only the diagonal D x D blocks (the
    # true per-head k_h^T v_h) are accumulated directly into the scratch slice (no
    # concat temporary, no full-width read-modify-write).
    for base in range(0, num_heads, heads_per_group):
        g = min(heads_per_group, num_heads - base)
        lo = base * D
        hi = (base + g) * D
        # Contract the T (sublane) axis directly — no transpose op.
        kv_grp = lax.dot_general(kb[:, lo:hi], vb[:, lo:hi],
                                 (((0,), (0,)), ((), ())),
                                 preferred_element_type=jnp.float32)   # (gD, gD)
        for j in range(g):
            r0 = (base + j) * D
            kv_acc[r0:r0 + D, :] += kv_grp[j * D:(j + 1) * D, j * D:(j + 1) * D]

    @pl.when(t == pl.num_programs(1) - 1)
    def _finalize():
        kvf = kv_acc[...]
        if m_ref.dtype == jnp.bfloat16:
            kvf = kvf.astype(jnp.bfloat16)
        for h in range(num_heads):
            lo = h * D
            hi = lo + D
            # Fold the output projection: M_h = kv_h @ Wo^T[hD:(h+1)D, :]  -> (D, E)
            m_ref[0, lo:hi, :] = jnp.dot(
                kvf[lo:hi, :], wo_ref[lo:hi, :],
                preferred_element_type=jnp.float32).astype(m_ref.dtype)
        ksum_ref[0] = ksum_acc[...]


def _output_body(q_in_ref, wq_ref, bq_ref, ksum_ref, m_ref, bo_ref, mask_ref, o_ref,
                 *, num_heads, head_dim, eps):
    """Phase 2: project Q, feature-map, per-head normalize, apply folded kv/out-proj."""
    xq = q_in_ref[0]                       # (Tt, E) bf16
    q = jnp.dot(xq, wq_ref[...], preferred_element_type=jnp.float32) + bq_ref[...]
    q = _elu_plus_one(q)                   # (Tt, E) f32

    ksum = ksum_ref[0]                     # (1, E) f32
    s = q * ksum                           # (Tt, E) f32

    if mask_ref is not None:
        # Lane-dense per-head denominator: one (Tt,E)@(E,E) matmul against the
        # block-diagonal ones mask broadcasts each head's sum across its lanes —
        # avoids sub-128 lane slices / masked cross-lane reductions when D % 128 != 0.
        denom = jnp.dot(s.astype(jnp.bfloat16), mask_ref[...],
                        preferred_element_type=jnp.float32) + eps       # (Tt, E)
        q_scaled = (q * pl.reciprocal(denom, approx=True)).astype(jnp.bfloat16)
    else:
        scaled = []
        for h in range(num_heads):
            lo = h * head_dim
            hi = lo + head_dim
            denom = jnp.sum(s[:, lo:hi], axis=-1, keepdims=True) + eps  # (Tt, 1)
            inv = pl.reciprocal(denom, approx=True)                     # EUP slot
            scaled.append(q[:, lo:hi] * inv)
        q_scaled = jnp.concatenate(scaled, axis=-1).astype(jnp.bfloat16)

    # One lane-dense (Tt,E)@(E,E) matmul produces attention output *and* out-projection.
    out = jnp.dot(q_scaled, m_ref[0], preferred_element_type=jnp.float32) + bo_ref[...]
    # TODO(synk): nn.Dropout is identity in eval / with p=0.0; no dropout applied here.
    o_ref[0] = out.astype(o_ref.dtype)


def _make_output_kernel(*, num_heads, head_dim, eps, use_mask):
    if use_mask:
        def kernel(q_in_ref, wq_ref, bq_ref, ksum_ref, m_ref, bo_ref, mask_ref, o_ref):
            _output_body(q_in_ref, wq_ref, bq_ref, ksum_ref, m_ref, bo_ref, mask_ref,
                         o_ref, num_heads=num_heads, head_dim=head_dim, eps=eps)
    else:
        def kernel(q_in_ref, wq_ref, bq_ref, ksum_ref, m_ref, bo_ref, o_ref):
            _output_body(q_in_ref, wq_ref, bq_ref, ksum_ref, m_ref, bo_ref, None,
                         o_ref, num_heads=num_heads, head_dim=head_dim, eps=eps)
    return kernel


def _round_up(x, m):
    return ((x + m - 1) // m) * m


def _pick_seq_tile(seq_len, max_tile):
    """Sequence tile: bf16-sublane friendly (mult. of 16) and MXU-friendly (mult. of 256
    when possible). The sequence is padded to a tile multiple, so no divisor search and
    no full-sequence fallback."""
    if seq_len <= max_tile:
        return _round_up(seq_len, 16 if seq_len >= 16 else 8)
    for quantum in (256, 16, 8):
        cand = (max_tile // quantum) * quantum
        if cand >= quantum:
            return cand
    return max(8, max_tile)


def _vmem_defaults():
    """(vmem_limit_bytes, max_seq_tile) tuned per TPU generation, with safe fallbacks."""
    try:
        cap = int(pltpu.get_tpu_info().vmem_capacity_bytes)
    except Exception:
        cap = 0
    if cap <= 0:
        return 48 << 20, 512            # conservative: fits v7x's 64 MiB physical VMEM
    limit = max(min(3 * cap // 4, 64 << 20), 32 << 20)   # v5e/v6e -> 64 MiB, v7x -> 48
    tile = 512 if cap <= (64 << 20) else 1024
    return limit, tile


def _run_with_fallback(call_fn, try_single_buffer):
    if try_single_buffer:
        try:
            return call_fn(True)
        except Exception:
            # pipeline_mode=pl.Buffered(1) unsupported on this Pallas build: fall back
            # to default (double) buffering of the grid-invariant operands.
            pass
    return call_fn(False)


def linear_attention(query, key, value, params, *, num_heads, eps=1e-6,
                     max_seq_tile=None, vmem_limit_bytes=None, mxu_width=128,
                     state_dtype=jnp.bfloat16, out_dtype=None,
                     single_buffer_weights=True):
    """Linear-attention forward (eval mode).

    mxu_width: target M/N extent of the per-head kv matmuls. 128 is optimal on v5e and
      safe everywhere; pass 256 on v6e/v7x to fill their 256-wide MXU when head_dim<256.
    state_dtype: dtype of the folded kv/out-proj state M (bf16 default; pass f32 for very
      long sequences where the O(T)-growing state needs more mantissa).
    out_dtype: output dtype (default: query.dtype; pass bf16 if the consumer allows it
      to halve output HBM traffic).
    """
    B, T, E = query.shape
    assert E % num_heads == 0, "embed_dim must be divisible by num_heads"
    head_dim = E // num_heads
    out_dtype = query.dtype if out_dtype is None else out_dtype

    default_limit, default_tile = _vmem_defaults()
    if vmem_limit_bytes is None:
        vmem_limit_bytes = default_limit
    if max_seq_tile is None:
        max_seq_tile = default_tile

    wq, bq, wk, bk, wv, bv, wo, bo = params  # PyTorch-style: w (out,in), b (E,) / (1,E)

    def prep_w(w):   # (out, in) -> (in, out), bf16 MXU operand (no in-kernel .T)
        return jnp.asarray(w, jnp.float32).T.astype(jnp.bfloat16)

    def prep_b(b):
        return jnp.asarray(b, jnp.float32).reshape(1, E)

    wq_t, wk_t, wv_t, wo_t = prep_w(wq), prep_w(wk), prep_w(wv), prep_w(wo)
    bq_r, bk_r, bv_r, bo_r = prep_b(bq), prep_b(bk), prep_b(bv), prep_b(bo)

    # Host-side cast: DMA activations as bf16 (halves HBM traffic and tile buffers).
    q_in = query.astype(jnp.bfloat16)
    k_in = key.astype(jnp.bfloat16)
    v_in = value.astype(jnp.bfloat16)

    # Sequence tiling: pad T up to a tile multiple; pad rows are masked out of the
    # phase-1 accumulation and sliced off the phase-2 output.
    t_tile = _pick_seq_tile(T, max_seq_tile)
    n_tiles = pl.cdiv(T, t_tile)
    t_pad = n_tiles * t_tile
    if t_pad != T:
        pad = ((0, 0), (0, t_pad - T), (0, 0))
        q_in = jnp.pad(q_in, pad)
        k_in = jnp.pad(k_in, pad)
        v_in = jnp.pad(v_in, pad)
    valid_len = T if t_pad != T else None

    heads_per_group = max(1, min(num_heads, mxu_width // max(1, head_dim)))
    use_mask = (head_dim % 128) != 0
    if use_mask:
        head_ids = jnp.arange(E, dtype=jnp.int32) // head_dim
        blockdiag = (head_ids[:, None] == head_ids[None, :]).astype(jnp.bfloat16)

    seq_spec = pl.BlockSpec((1, t_tile, E), lambda b, t: (b, t, 0))
    ksum_spec = pl.BlockSpec((1, 1, E), lambda b, t: (b, 0, 0))
    m_spec = pl.BlockSpec((1, E, E), lambda b, t: (b, 0, 0))

    def const_spec(shape, single):
        # Grid-invariant operand (constant index_map): single-buffer it when supported.
        index_map = lambda b, t: (0,) * len(shape)
        if single:
            return pl.BlockSpec(shape, index_map, pipeline_mode=pl.Buffered(1))
        return pl.BlockSpec(shape, index_map)

    kv_kernel = functools.partial(
        _kv_state_kernel, num_heads=num_heads, head_dim=head_dim,
        heads_per_group=heads_per_group, t_tile=t_tile, valid_len=valid_len)
    out_kernel = _make_output_kernel(num_heads=num_heads, head_dim=head_dim,
                                     eps=eps, use_mask=use_mask)

    # Phase 1: per-batch kv state (k_sum + out-proj-folded M), accumulated over T tiles.
    def run_phase1(single):
        w_spec = const_spec((E, E), single)
        b_spec = const_spec((1, E), single)
        return pl.pallas_call(
            kv_kernel,
            out_shape=(jax.ShapeDtypeStruct((B, 1, E), jnp.float32),
                       jax.ShapeDtypeStruct((B, E, E), state_dtype)),
            grid_spec=pltpu.PrefetchScalarGridSpec(
                num_scalar_prefetch=0,
                grid=(B, n_tiles),
                in_specs=[seq_spec, seq_spec,          # key, value tiles (bf16)
                          w_spec, b_spec,              # Wk^T, bk
                          w_spec, b_spec,              # Wv^T, bv
                          w_spec],                     # Wo^T (folded into M)
                out_specs=(ksum_spec, m_spec),
                scratch_shapes=[pltpu.VMEM((1, E), jnp.float32),
                                pltpu.VMEM((E, head_dim), jnp.float32)],
            ),
            compiler_params=pltpu.CompilerParams(
                dimension_semantics=("parallel", "arbitrary"),
                vmem_limit_bytes=vmem_limit_bytes),
        )(k_in, v_in, wk_t, bk_r, wv_t, bv_r, wo_t)

    ksum, m = _run_with_fallback(run_phase1, single_buffer_weights)

    # Phase 2: per (batch, T tile) output — both grid axes independent ("parallel",
    # so both v7x TensorCores stay busy).
    def run_phase2(single):
        w_spec = const_spec((E, E), single)
        b_spec = const_spec((1, E), single)
        in_specs = [seq_spec, w_spec, b_spec, ksum_spec, m_spec, b_spec]
        args = [q_in, wq_t, bq_r, ksum, m, bo_r]
        if use_mask:
            in_specs.append(const_spec((E, E), single))
            args.append(blockdiag)
        return pl.pallas_call(
            out_kernel,
            out_shape=jax.ShapeDtypeStruct((B, t_pad, E), out_dtype),
            grid_spec=pltpu.PrefetchScalarGridSpec(
                num_scalar_prefetch=0,
                grid=(B, n_tiles),
                in_specs=in_specs,
                out_specs=seq_spec,
            ),
            compiler_params=pltpu.CompilerParams(
                dimension_semantics=("parallel", "parallel"),
                vmem_limit_bytes=vmem_limit_bytes),
        )(*args)

    out = _run_with_fallback(run_phase2, single_buffer_weights)

    if t_pad != T:
        out = out[:, :T, :]
    # TODO(synk): key_padding_mask is accepted by the PyTorch module but unused in its
    # forward; dropout is identity in eval mode — neither is applied here.
    # TODO(synk): on v7x with small batch, phase 1 could add a "parallel" head-group grid
    # axis so the second TensorCore shares the reduction; not implemented here.
    return out


def _reference(query, key, value, params, *, num_heads, eps=1e-6):
    # Pure-JAX f32 mirror of the PyTorch forward, for correctness checking.
    wq, bq, wk, bk, wv, bv, wo, bo = params
    B, T, E = query.shape
    D = E // num_heads

    def proj(x, w, b):
        return x @ w.T + b.reshape(1, 1, E)

    q = proj(query, wq, bq).reshape(B, T, num_heads, D).transpose(0, 2, 1, 3)
    k = proj(key, wk, bk).reshape(B, T, num_heads, D).transpose(0, 2, 1, 3)
    v = proj(value, wv, bv).reshape(B, T, num_heads, D).transpose(0, 2, 1, 3)
    q = jnp.where(q > 0, q + 1.0, jnp.exp(jnp.minimum(q, 0.0)))
    k = jnp.where(k > 0, k + 1.0, jnp.exp(jnp.minimum(k, 0.0)))
    k_sum = k.sum(axis=2)                                    # (B,H,D)
    denom = jnp.einsum('bhtd,bhd->bht', q, k_sum) + eps      # (B,H,T)
    kv = jnp.einsum('bhtd,bhtv->bhdv', k, v)                 # (B,H,D,D)
    out = jnp.einsum('bhtd,bhde->bhte', q, kv) / denom[..., None]
    out = out.transpose(0, 2, 1, 3).reshape(B, T, E)
    return out @ wo.T + bo.reshape(1, 1, E)


def _init_params(key, embed_dim):
    # Deterministic synthetic init (PyTorch nn.Linear-style uniform bound).
    bound = 1.0 / jnp.sqrt(embed_dim)
    keys = jax.random.split(key, 8)
    params = []
    for i in range(4):
        w = jax.random.uniform(keys[2 * i], (embed_dim, embed_dim),
                               jnp.float32, -bound, bound)
        b = jax.random.uniform(keys[2 * i + 1], (1, embed_dim),
                               jnp.float32, -bound, bound)
        params += [w, b]
    return tuple(params)


if __name__ == "__main__":
    # T=24 with max_seq_tile=16 -> t_tile=16, two tiles, T padded to 32 (exercises the
    # tiled accumulation, pad-row masking, head-grouped kv matmuls, and the lane-dense
    # block-diagonal denominator path since head_dim=8 is not a multiple of 128).
    B, T, E, H = 2, 24, 32, 4

    root = jax.random.PRNGKey(0)
    k_q, k_k, k_v, k_p = jax.random.split(root, 4)
    query = jax.random.normal(k_q, (B, T, E), jnp.float32)
    key = jax.random.normal(k_k, (B, T, E), jnp.float32)
    value = jax.random.normal(k_v, (B, T, E), jnp.float32)
    params = _init_params(k_p, E)

    out = linear_attention(query, key, value, params, num_heads=H, eps=1e-6,
                           max_seq_tile=16)
    out = jax.block_until_ready(out)

    ref = _reference(query, key, value, params, num_heads=H, eps=1e-6)
    assert out.shape == (B, T, E)
    # Kernel uses bf16 MXU operands (f32 accumulation), a bf16 kv state and approx
    # reciprocal; compare against the pure-f32 reference with a bf16-level tolerance.
    outf = out.astype(jnp.float32)
    max_err = float(jnp.max(jnp.abs(outf - ref)))
    assert jnp.allclose(outf, ref, atol=4e-2, rtol=4e-2), max_err

    print("KERNEL_OK")
</pallas_src>

<mosaic_0001>
module attributes {stable_mosaic.version = 11 : i64} {
  func.func @_kv_state_kernel(%arg0: i32, %arg1: i32, %arg2: memref<1x16x32xbf16, #tpu.memory_space<vmem>>, %arg3: memref<1x16x32xbf16, #tpu.memory_space<vmem>>, %arg4: memref<32x32xbf16, #tpu.memory_space<vmem>>, %arg5: memref<1x32xf32, #tpu.memory_space<vmem>>, %arg6: memref<32x32xbf16, #tpu.memory_space<vmem>>, %arg7: memref<1x32xf32, #tpu.memory_space<vmem>>, %arg8: memref<32x32xbf16, #tpu.memory_space<vmem>>, %arg9: memref<1x1x32xf32, #tpu.memory_space<vmem>>, %arg10: memref<1x32x32xbf16, #tpu.memory_space<vmem>>, %arg11: memref<1x32xf32, #tpu.memory_space<vmem>>, %arg12: memref<32x8xf32, #tpu.memory_space<vmem>>) attributes {dimension_semantics = [#tpu.dimension_semantics<parallel>, #tpu.dimension_semantics<arbitrary>], iteration_bounds = array<i64: 2, 2>, scalar_prefetch = 0 : i64, scratch_operands = 2 : i64, tpu.core_type = #tpu.core_type<tc>, window_params = [{transform_indices = @transform_0, window_bounds = array<i64: 1, 16, 32>}, {transform_indices = @transform_1, window_bounds = array<i64: 1, 16, 32>}, {pipeline_mode = #tpu.pipeline_mode<synchronous>, transform_indices = @transform_2, window_bounds = array<i64: 32, 32>}, {pipeline_mode = #tpu.pipeline_mode<synchronous>, transform_indices = @transform_3, window_bounds = array<i64: 1, 32>}, {pipeline_mode = #tpu.pipeline_mode<synchronous>, transform_indices = @transform_4, window_bounds = array<i64: 32, 32>}, {pipeline_mode = #tpu.pipeline_mode<synchronous>, transform_indices = @transform_5, window_bounds = array<i64: 1, 32>}, {pipeline_mode = #tpu.pipeline_mode<synchronous>, transform_indices = @transform_6, window_bounds = array<i64: 32, 32>}, {transform_indices = @transform_7, window_bounds = array<i64: 1, 1, 32>}, {transform_indices = @transform_8, window_bounds = array<i64: 1, 32, 32>}]} {
    %c0_i32 = arith.constant 0 : i32
    %0 = arith.cmpi eq, %arg1, %c0_i32 : i32
    %1 = arith.extui %0 : i1 to i32
    %c0_i32_0 = arith.constant 0 : i32
    %2 = arith.cmpi ne, %1, %c0_i32_0 : i32
    scf.if %2 {
      %cst_39 = arith.constant 0.000000e+00 : f32
      %60 = vector.broadcast %cst_39 : f32 to vector<1x32xf32>
      %c0_40 = arith.constant 0 : index
      %c0_41 = arith.constant 0 : index
      %61 = vector.load %arg11[%c0_40, %c0_41] : memref<1x32xf32, #tpu.memory_space<vmem>>, vector<1x32xf32>
      tpu.vector_store %arg11[%c0_40, %c0_41], %60 {strides = array<i32>} : memref<1x32xf32, #tpu.memory_space<vmem>>, vector<1x32xf32>,
      %cst_42 = arith.constant 0.000000e+00 : f32
      %62 = vector.broadcast %cst_42 : f32 to vector<32x8xf32>
      %c0_43 = arith.constant 0 : index
      %c0_44 = arith.constant 0 : index
      %63 = vector.load %arg12[%c0_43, %c0_44] : memref<32x8xf32, #tpu.memory_space<vmem>>, vector<32x8xf32>
      tpu.vector_store %arg12[%c0_43, %c0_44], %62 {strides = array<i32>} : memref<32x8xf32, #tpu.memory_space<vmem>>, vector<32x8xf32>,
    } else {
    }
    %c0 = arith.constant 0 : index
    %c0_1 = arith.constant 0 : index
    %c0_2 = arith.constant 0 : index
    %3 = vector.load %arg2[%c0, %c0_1, %c0_2] : memref<1x16x32xbf16, #tpu.memory_space<vmem>>, vector<1x16x32xbf16>
    %4 = vector.shape_cast %3 : vector<1x16x32xbf16> to vector<16x32xbf16>
    %c0_3 = arith.constant 0 : index
    %c0_4 = arith.constant 0 : index
    %c0_5 = arith.constant 0 : index
    %5 = vector.load %arg3[%c0_3, %c0_4, %c0_5] : memref<1x16x32xbf16, #tpu.memory_space<vmem>>, vector<1x16x32xbf16>
    %6 = vector.shape_cast %5 : vector<1x16x32xbf16> to vector<16x32xbf16>
    %c0_6 = arith.constant 0 : index
    %c0_7 = arith.constant 0 : index
    %7 = vector.load %arg4[%c0_6, %c0_7] : memref<32x32xbf16, #tpu.memory_space<vmem>>, vector<32x32xbf16>
    %cst = arith.constant dense<0.000000e+00> : vector<16x32xf32>
    %8 = tpu.matmul %4, %7, %cst {dimension_numbers = #tpu.dot_dimension_numbers<[1], [0], [0], [1], [0, 0, 1, 1], [], []>} : vector<16x32xbf16>, vector<32x32xbf16>, vector<16x32xf32> -> vector<16x32xf32>
    %c0_8 = arith.constant 0 : index
    %c0_9 = arith.constant 0 : index
    %9 = vector.load %arg5[%c0_8, %c0_9] : memref<1x32xf32, #tpu.memory_space<vmem>>, vector<1x32xf32>
    %10 = vector.broadcast %9 : vector<1x32xf32> to vector<16x32xf32>
    %11 = arith.addf %8, %10 : vector<16x32xf32>
    %c0_10 = arith.constant 0 : index
    %c0_11 = arith.constant 0 : index
    %12 = vector.load %arg6[%c0_10, %c0_11] : memref<32x32xbf16, #tpu.memory_space<vmem>>, vector<32x32xbf16>
    %cst_12 = arith.constant dense<0.000000e+00> : vector<16x32xf32>
    %13 = tpu.matmul %6, %12, %cst_12 {dimension_numbers = #tpu.dot_dimension_numbers<[1], [0], [0], [1], [0, 0, 1, 1], [], []>} : vector<16x32xbf16>, vector<32x32xbf16>, vector<16x32xf32> -> vector<16x32xf32>
    %c0_13 = arith.constant 0 : index
    %c0_14 = arith.constant 0 : index
    %14 = vector.load %arg7[%c0_13, %c0_14] : memref<1x32xf32, #tpu.memory_space<vmem>>, vector<1x32xf32>
    %15 = vector.broadcast %14 : vector<1x32xf32> to vector<16x32xf32>
    %16 = arith.addf %13, %15 : vector<16x32xf32>
    %cst_15 = arith.constant 0.000000e+00 : f32
    %17 = vector.broadcast %cst_15 : f32 to vector<16x32xf32>
    %18 = arith.cmpf ogt, %11, %17 : vector<16x32xf32>
    %cst_16 = arith.constant 1.000000e+00 : f32
    %19 = vector.broadcast %cst_16 : f32 to vector<16x32xf32>
    %20 = arith.addf %11, %19 : vector<16x32xf32>
    %cst_17 = arith.constant 0.000000e+00 : f32
    %21 = vector.broadcast %cst_17 : f32 to vector<16x32xf32>
    %22 = arith.minimumf %11, %21 : vector<16x32xf32>
    %23 = math.exp %22 : vector<16x32xf32>
    %24 = arith.select %18, %20, %23 : vector<16x32xi1>, vector<16x32xf32>
    %c16_i32 = arith.constant 16 : i32
    %25 = arith.muli %arg1, %c16_i32 : i32
    %26 = tpu.iota {dimensions = array<i32: 0>} : vector<16x32xi32>
    %27 = vector.broadcast %25 : i32 to vector<16x32xi32>
    %28 = arith.addi %27, %26 : vector<16x32xi32>
    %c24_i32 = arith.constant 24 : i32
    %29 = vector.broadcast %c24_i32 : i32 to vector<16x32xi32>
    %30 = arith.cmpi slt, %28, %29 : vector<16x32xi32>
    %cst_18 = arith.constant 0.000000e+00 : f32
    %31 = vector.broadcast %cst_18 : f32 to vector<16x32xf32>
    %32 = arith.select %30, %24, %31 : vector<16x32xi1>, vector<16x32xf32>
    %c0_19 = arith.constant 0 : index
    %c0_20 = arith.constant 0 : index
    %33 = vector.load %arg11[%c0_19, %c0_20] : memref<1x32xf32, #tpu.memory_space<vmem>>, vector<1x32xf32>
    %cst_21 = arith.constant dense<0.000000e+00> : vector<32xf32>
    %34 = vector.multi_reduction <add>, %32, %cst_21 [0] : vector<16x32xf32> to vector<32xf32>
    %35 = vector.shape_cast %34 : vector<32xf32> to vector<1x32xf32>
    %36 = arith.addf %33, %35 : vector<1x32xf32>
    %c0_22 = arith.constant 0 : index
    %c0_23 = arith.constant 0 : index
    %37 = vector.load %arg11[%c0_22, %c0_23] : memref<1x32xf32, #tpu.memory_space<vmem>>, vector<1x32xf32>
    tpu.vector_store %arg11[%c0_22, %c0_23], %36 {strides = array<i32>} : memref<1x32xf32, #tpu.memory_space<vmem>>, vector<1x32xf32>,
    %38 = arith.truncf %32 : vector<16x32xf32> to vector<16x32xbf16>
    %39 = arith.truncf %16 : vector<16x32xf32> to vector<16x32xbf16>
    %cst_24 = arith.constant dense<0.000000e+00> : vector<32x32xf32>
    %40 = tpu.matmul %38, %39, %cst_24 {dimension_numbers = #tpu.dot_dimension_numbers<[0], [0], [1], [1], [0, 1, 1, 1], [], []>} : vector<16x32xbf16>, vector<16x32xbf16>, vector<32x32xf32> -> vector<32x32xf32>
    %c0_25 = arith.constant 0 : index
    %c0_26 = arith.constant 0 : index
    %41 = vector.load %arg12[%c0_25, %c0_26] : memref<32x8xf32, #tpu.memory_space<vmem>>, vector<8x8xf32>
    %42 = vector.extract_strided_slice %40 {offsets = [0, 0], sizes = [8, 8], strides = [1, 1]} : vector<32x32xf32> to vector<8x8xf32>
    %43 = arith.addf %41, %42 : vector<8x8xf32>
    %c0_27 = arith.constant 0 : index
    %c0_28 = arith.constant 0 : index
    %44 = vector.load %arg12[%c0_27, %c0_28] : memref<32x8xf32, #tpu.memory_space<vmem>>, vector<8x8xf32>
    tpu.vector_store %arg12[%c0_27, %c0_28], %43 {strides = array<i32>} : memref<32x8xf32, #tpu.memory_space<vmem>>, vector<8x8xf32>,
    %c8 = arith.constant 8 : index
    %c0_29 = arith.constant 0 : index
    %45 = vector.load %arg12[%c8, %c0_29] : memref<32x8xf32, #tpu.memory_space<vmem>>, vector<8x8xf32>
    %46 = vector.extract_strided_slice %40 {offsets = [8, 8], sizes = [8, 8], strides = [1, 1]} : vector<32x32xf32> to vector<8x8xf32>
    %47 = arith.addf %45, %46 : vector<8x8xf32>
    %c8_30 = arith.constant 8 : index
    %c0_31 = arith.constant 0 : index
    %48 = vector.load %arg12[%c8_30, %c0_31] : memref<32x8xf32, #tpu.memory_space<vmem>>, vector<8x8xf32>
    tpu.vector_store %arg12[%c8_30, %c0_31], %47 {strides = array<i32>} : memref<32x8xf32, #tpu.memory_space<vmem>>, vector<8x8xf32>,
    %c16 = arith.constant 16 : index
    %c0_32 = arith.constant 0 : index
    %49 = vector.load %arg12[%c16, %c0_32] : memref<32x8xf32, #tpu.memory_space<vmem>>, vector<8x8xf32>
    %50 = vector.extract_strided_slice %40 {offsets = [16, 16], sizes = [8, 8], strides = [1, 1]} : vector<32x32xf32> to vector<8x8xf32>
    %51 = arith.addf %49, %50 : vector<8x8xf32>
    %c16_33 = arith.constant 16 : index
    %c0_34 = arith.constant 0 : index
    %52 = vector.load %arg12[%c16_33, %c0_34] : memref<32x8xf32, #tpu.memory_space<vmem>>, vector<8x8xf32>
    tpu.vector_store %arg12[%c16_33, %c0_34], %51 {strides = array<i32>} : memref<32x8xf32, #tpu.memory_space<vmem>>, vector<8x8xf32>,
    %c24 = arith.constant 24 : index
    %c0_35 = arith.constant 0 : index
    %53 = vector.load %arg12[%c24, %c0_35] : memref<32x8xf32, #tpu.memory_space<vmem>>, vector<8x8xf32>
    %54 = vector.extract_strided_slice %40 {offsets = [24, 24], sizes = [8, 8], strides = [1, 1]} : vector<32x32xf32> to vector<8x8xf32>
    %55 = arith.addf %53, %54 : vector<8x8xf32>
    %c24_36 = arith.constant 24 : index
    %c0_37 = arith.constant 0 : index
    %56 = vector.load %arg12[%c24_36, %c0_37] : memref<32x8xf32, #tpu.memory_space<vmem>>, vector<8x8xf32>
    tpu.vector_store %arg12[%c24_36, %c0_37], %55 {strides = array<i32>} : memref<32x8xf32, #tpu.memory_space<vmem>>, vector<8x8xf32>,
    %c1_i32 = arith.constant 1 : i32
    %57 = arith.cmpi eq, %arg1, %c1_i32 : i32
    %58 = arith.extui %57 : i1 to i32
    %c0_i32_38 = arith.constant 0 : i32
    %59 = arith.cmpi ne, %58, %c0_i32_38 : i32
    scf.if %59 {
      %c0_39 = arith.constant 0 : index
      %c0_40 = arith.constant 0 : index
      %60 = vector.load %arg12[%c0_39, %c0_40] : memref<32x8xf32, #tpu.memory_space<vmem>>, vector<32x8xf32>
      %61 = arith.truncf %60 : vector<32x8xf32> to vector<32x8xbf16>
      %62 = vector.extract_strided_slice %61 {offsets = [0, 0], sizes = [8, 8], strides = [1, 1]} : vector<32x8xbf16> to vector<8x8xbf16>
      %c0_41 = arith.constant 0 : index
      %c0_42 = arith.constant 0 : index
      %63 = vector.load %arg8[%c0_41, %c0_42] : memref<32x32xbf16, #tpu.memory_space<vmem>>, vector<8x32xbf16>
      %cst_43 = arith.constant dense<0.000000e+00> : vector<8x32xf32>
      %64 = tpu.matmul %62, %63, %cst_43 {dimension_numbers = #tpu.dot_dimension_numbers<[1], [0], [0], [1], [0, 0, 1, 1], [], []>} : vector<8x8xbf16>, vector<8x32xbf16>, vector<8x32xf32> -> vector<8x32xf32>
      %65 = arith.truncf %64 : vector<8x32xf32> to vector<8x32xbf16>
      %c0_44 = arith.constant 0 : index
      %c0_45 = arith.constant 0 : index
      %c0_46 = arith.constant 0 : index
      %66 = vector.load %arg10[%c0_44, %c0_45, %c0_46] : memref<1x32x32xbf16, #tpu.memory_space<vmem>>, vector<1x8x32xbf16>
      %67 = vector.shape_cast %66 : vector<1x8x32xbf16> to vector<8x32xbf16>
      %68 = vector.shape_cast %65 : vector<8x32xbf16> to vector<1x8x32xbf16>
      tpu.vector_store %arg10[%c0_44, %c0_45, %c0_46], %68 {strides = array<i32>} : memref<1x32x32xbf16, #tpu.memory_space<vmem>>, vector<1x8x32xbf16>,
      %69 = vector.extract_strided_slice %61 {offsets = [8, 0], sizes = [8, 8], strides = [1, 1]} : vector<32x8xbf16> to vector<8x8xbf16>
      %c8_47 = arith.constant 8 : index
      %c0_48 = arith.constant 0 : index
      %70 = vector.load %arg8[%c8_47, %c0_48] : memref<32x32xbf16, #tpu.memory_space<vmem>>, vector<8x32xbf16>
      %cst_49 = arith.constant dense<0.000000e+00> : vector<8x32xf32>
      %71 = tpu.matmul %69, %70, %cst_49 {dimension_numbers = #tpu.dot_dimension_numbers<[1], [0], [0], [1], [0, 0, 1, 1], [], []>} : vector<8x8xbf16>, vector<8x32xbf16>, vector<8x32xf32> -> vector<8x32xf32>
      %72 = arith.truncf %71 : vector<8x32xf32> to vector<8x32xbf16>
      %c0_50 = arith.constant 0 : index
      %c8_51 = arith.constant 8 : index
      %c0_52 = arith.constant 0 : index
      %73 = vector.load %arg10[%c0_50, %c8_51, %c0_52] : memref<1x32x32xbf16, #tpu.memory_space<vmem>>, vector<1x8x32xbf16>
      %74 = vector.shape_cast %73 : vector<1x8x32xbf16> to vector<8x32xbf16>
      %75 = vector.shape_cast %72 : vector<8x32xbf16> to vector<1x8x32xbf16>
      tpu.vector_store %arg10[%c0_50, %c8_51, %c0_52], %75 {strides = array<i32>} : memref<1x32x32xbf16, #tpu.memory_space<vmem>>, vector<1x8x32xbf16>,
      %76 = vector.extract_strided_slice %61 {offsets = [16, 0], sizes = [8, 8], strides = [1, 1]} : vector<32x8xbf16> to vector<8x8xbf16>
      %c16_53 = arith.constant 16 : index
      %c0_54 = arith.constant 0 : index
      %77 = vector.load %arg8[%c16_53, %c0_54] : memref<32x32xbf16, #tpu.memory_space<vmem>>, vector<8x32xbf16>
      %cst_55 = arith.constant dense<0.000000e+00> : vector<8x32xf32>
      %78 = tpu.matmul %76, %77, %cst_55 {dimension_numbers = #tpu.dot_dimension_numbers<[1], [0], [0], [1], [0, 0, 1, 1], [], []>} : vector<8x8xbf16>, vector<8x32xbf16>, vector<8x32xf32> -> vector<8x32xf32>
      %79 = arith.truncf %78 : vector<8x32xf32> to vector<8x32xbf16>
      %c0_56 = arith.constant 0 : index
      %c16_57 = arith.constant 16 : index
      %c0_58 = arith.constant 0 : index
      %80 = vector.load %arg10[%c0_56, %c16_57, %c0_58] : memref<1x32x32xbf16, #tpu.memory_space<vmem>>, vector<1x8x32xbf16>
      %81 = vector.shape_cast %80 : vector<1x8x32xbf16> to vector<8x32xbf16>
      %82 = vector.shape_cast %79 : vector<8x32xbf16> to vector<1x8x32xbf16>
      tpu.vector_store %arg10[%c0_56, %c16_57, %c0_58], %82 {strides = array<i32>} : memref<1x32x32xbf16, #tpu.memory_space<vmem>>, vector<1x8x32xbf16>,
      %83 = vector.extract_strided_slice %61 {offsets = [24, 0], sizes = [8, 8], strides = [1, 1]} : vector<32x8xbf16> to vector<8x8xbf16>
      %c24_59 = arith.constant 24 : index
      %c0_60 = arith.constant 0 : index
      %84 = vector.load %arg8[%c24_59, %c0_60] : memref<32x32xbf16, #tpu.memory_space<vmem>>, vector<8x32xbf16>
      %cst_61 = arith.constant dense<0.000000e+00> : vector<8x32xf32>
      %85 = tpu.matmul %83, %84, %cst_61 {dimension_numbers = #tpu.dot_dimension_numbers<[1], [0], [0], [1], [0, 0, 1, 1], [], []>} : vector<8x8xbf16>, vector<8x32xbf16>, vector<8x32xf32> -> vector<8x32xf32>
      %86 = arith.truncf %85 : vector<8x32xf32> to vector<8x32xbf16>
      %c0_62 = arith.constant 0 : index
      %c24_63 = arith.constant 24 : index
      %c0_64 = arith.constant 0 : index
      %87 = vector.load %arg10[%c0_62, %c24_63, %c0_64] : memref<1x32x32xbf16, #tpu.memory_space<vmem>>, vector<1x8x32xbf16>
      %88 = vector.shape_cast %87 : vector<1x8x32xbf16> to vector<8x32xbf16>
      %89 = vector.shape_cast %86 : vector<8x32xbf16> to vector<1x8x32xbf16>
      tpu.vector_store %arg10[%c0_62, %c24_63, %c0_64], %89 {strides = array<i32>} : memref<1x32x32xbf16, #tpu.memory_space<vmem>>, vector<1x8x32xbf16>,
      %c0_65 = arith.constant 0 : index
      %c0_66 = arith.constant 0 : index
      %90 = vector.load %arg11[%c0_65, %c0_66] : memref<1x32xf32, #tpu.memory_space<vmem>>, vector<1x32xf32>
      %c0_67 = arith.constant 0 : index
      %c0_68 = arith.constant 0 : index
      %c0_69 = arith.constant 0 : index
      %91 = vector.load %arg9[%c0_67, %c0_68, %c0_69] : memref<1x1x32xf32, #tpu.memory_space<vmem>>, vector<1x1x32xf32>
      %92 = vector.shape_cast %91 : vector<1x1x32xf32> to vector<1x32xf32>
      %93 = vector.shape_cast %90 : vector<1x32xf32> to vector<1x1x32xf32>
      tpu.vector_store %arg9[%c0_67, %c0_68, %c0_69], %93 {strides = array<i32>} : memref<1x1x32xf32, #tpu.memory_space<vmem>>, vector<1x1x32xf32>,
    } else {
    }
    return
  }
  func.func @transform_0(%arg0: i32, %arg1: i32) -> (i32, i32, i32) {
    %c0_i32 = arith.constant 0 : i32
    %c0_i32_0 = arith.constant 0 : i32
    return %arg0, %arg1, %c0_i32 : i32, i32, i32
  }
  func.func @transform_1(%arg0: i32, %arg1: i32) -> (i32, i32, i32) {
    %c0_i32 = arith.constant 0 : i32
    %c0_i32_0 = arith.constant 0 : i32
    return %arg0, %arg1, %c0_i32 : i32, i32, i32
  }
  func.func @transform_2(%arg0: i32, %arg1: i32) -> (i32, i32) {
    %c0_i32 = arith.constant 0 : i32
    %c0_i32_0 = arith.constant 0 : i32
    %c0_i32_1 = arith.constant 0 : i32
    return %c0_i32, %c0_i32_0 : i32, i32
  }
  func.func @transform_3(%arg0: i32, %arg1: i32) -> (i32, i32) {
    %c0_i32 = arith.constant 0 : i32
    %c0_i32_0 = arith.constant 0 : i32
    %c0_i32_1 = arith.constant 0 : i32
    return %c0_i32, %c0_i32_0 : i32, i32
  }
  func.func @transform_4(%arg0: i32, %arg1: i32) -> (i32, i32) {
    %c0_i32 = arith.constant 0 : i32
    %c0_i32_0 = arith.constant 0 : i32
    %c0_i32_1 = arith.constant 0 : i32
    return %c0_i32, %c0_i32_0 : i32, i32
  }
  func.func @transform_5(%arg0: i32, %arg1: i32) -> (i32, i32) {
    %c0_i32 = arith.constant 0 : i32
    %c0_i32_0 = arith.constant 0 : i32
    %c0_i32_1 = arith.constant 0 : i32
    return %c0_i32, %c0_i32_0 : i32, i32
  }
  func.func @transform_6(%arg0: i32, %arg1: i32) -> (i32, i32) {
    %c0_i32 = arith.constant 0 : i32
    %c0_i32_0 = arith.constant 0 : i32
    %c0_i32_1 = arith.constant 0 : i32
    return %c0_i32, %c0_i32_0 : i32, i32
  }
  func.func @transform_7(%arg0: i32, %arg1: i32) -> (i32, i32, i32) {
    %c0_i32 = arith.constant 0 : i32
    %c0_i32_0 = arith.constant 0 : i32
    %c0_i32_1 = arith.constant 0 : i32
    return %arg0, %c0_i32, %c0_i32_0 : i32, i32, i32
  }
  func.func @transform_8(%arg0: i32, %arg1: i32) -> (i32, i32, i32) {
    %c0_i32 = arith.constant 0 : i32
    %c0_i32_0 = arith.constant 0 : i32
    %c0_i32_1 = arith.constant 0 : i32
    return %arg0, %c0_i32, %c0_i32_0 : i32, i32, i32
  }
}

module attributes {stable_mosaic.version = 11 : i64} {
  func.func @_kv_state_kernel(%arg0: i32, %arg1: i32, %arg2: memref<1x16x32xbf16, #tpu.memory_space<vmem>>, %arg3: memref<1x16x32xbf16, #tpu.memory_space<vmem>>, %arg4: memref<32x32xbf16, #tpu.memory_space<vmem>>, %arg5: memref<1x32xf32, #tpu.memory_space<vmem>>, %arg6: memref<32x32xbf16, #tpu.memory_space<vmem>>, %arg7: memref<1x32xf32, #tpu.memory_space<vmem>>, %arg8: memref<32x32xbf16, #tpu.memory_space<vmem>>, %arg9: memref<1x1x32xf32, #tpu.memory_space<vmem>>, %arg10: memref<1x32x32xbf16, #tpu.memory_space<vmem>>, %arg11: memref<1x32xf32, #tpu.memory_space<vmem>>, %arg12: memref<32x8xf32, #tpu.memory_space<vmem>>) attributes {dimension_semantics = [#tpu.dimension_semantics<parallel>, #tpu.dimension_semantics<arbitrary>], iteration_bounds = array<i64: 2, 2>, scalar_prefetch = 0 : i64, scratch_operands = 2 : i64, tpu.core_type = #tpu.core_type<tc>, window_params = [{transform_indices = @transform_0, window_bounds = array<i64: 1, 16, 32>}, {transform_indices = @transform_1, window_bounds = array<i64: 1, 16, 32>}, {pipeline_mode = #tpu.pipeline_mode<synchronous>, transform_indices = @transform_2, window_bounds = array<i64: 32, 32>}, {pipeline_mode = #tpu.pipeline_mode<synchronous>, transform_indices = @transform_3, window_bounds = array<i64: 1, 32>}, {pipeline_mode = #tpu.pipeline_mode<synchronous>, transform_indices = @transform_4, window_bounds = array<i64: 32, 32>}, {pipeline_mode = #tpu.pipeline_mode<synchronous>, transform_indices = @transform_5, window_bounds = array<i64: 1, 32>}, {pipeline_mode = #tpu.pipeline_mode<synchronous>, transform_indices = @transform_6, window_bounds = array<i64: 32, 32>}, {transform_indices = @transform_7, window_bounds = array<i64: 1, 1, 32>}, {transform_indices = @transform_8, window_bounds = array<i64: 1, 32, 32>}]} {
    %c0_i32 = arith.constant 0 : i32
    %0 = arith.cmpi eq, %arg1, %c0_i32 : i32
    %1 = arith.extui %0 : i1 to i32
    %c0_i32_0 = arith.constant 0 : i32
    %2 = arith.cmpi ne, %1, %c0_i32_0 : i32
    scf.if %2 {
      %cst_39 = arith.constant 0.000000e+00 : f32
      %60 = vector.broadcast %cst_39 : f32 to vector<1x32xf32>
      %c0_40 = arith.constant 0 : index
      %c0_41 = arith.constant 0 : index
      %61 = vector.load %arg11[%c0_40, %c0_41] : memref<1x32xf32, #tpu.memory_space<vmem>>, vector<1x32xf32>
      tpu.vector_store %arg11[%c0_40, %c0_41], %60 {strides = array<i32>} : memref<1x32xf32, #tpu.memory_space<vmem>>, vector<1x32xf32>,
      %cst_42 = arith.constant 0.000000e+00 : f32
      %62 = vector.broadcast %cst_42 : f32 to vector<32x8xf32>
      %c0_43 = arith.constant 0 : index
      %c0_44 = arith.constant 0 : index
      %63 = vector.load %arg12[%c0_43, %c0_44] : memref<32x8xf32, #tpu.memory_space<vmem>>, vector<32x8xf32>
      tpu.vector_store %arg12[%c0_43, %c0_44], %62 {strides = array<i32>} : memref<32x8xf32, #tpu.memory_space<vmem>>, vector<32x8xf32>,
    } else {
    }
    %c0 = arith.constant 0 : index
    %c0_1 = arith.constant 0 : index
    %c0_2 = arith.constant 0 : index
    %3 = vector.load %arg2[%c0, %c0_1, %c0_2] : memref<1x16x32xbf16, #tpu.memory_space<vmem>>, vector<1x16x32xbf16>
    %4 = vector.shape_cast %3 : vector<1x16x32xbf16> to vector<16x32xbf16>
    %c0_3 = arith.constant 0 : index
    %c0_4 = arith.constant 0 : index
    %c0_5 = arith.constant 0 : index
    %5 = vector.load %arg3[%c0_3, %c0_4, %c0_5] : memref<1x16x32xbf16, #tpu.memory_space<vmem>>, vector<1x16x32xbf16>
    %6 = vector.shape_cast %5 : vector<1x16x32xbf16> to vector<16x32xbf16>
    %c0_6 = arith.constant 0 : index
    %c0_7 = arith.constant 0 : index
    %7 = vector.load %arg4[%c0_6, %c0_7] : memref<32x32xbf16, #tpu.memory_space<vmem>>, vector<32x32xbf16>
    %cst = arith.constant dense<0.000000e+00> : vector<16x32xf32>
    %8 = tpu.matmul %4, %7, %cst {dimension_numbers = #tpu.dot_dimension_numbers<[1], [0], [0], [1], [0, 0, 1, 1], [], []>} : vector<16x32xbf16>, vector<32x32xbf16>, vector<16x32xf32> -> vector<16x32xf32>
    %c0_8 = arith.constant 0 : index
    %c0_9 = arith.constant 0 : index
    %9 = vector.load %arg5[%c0_8, %c0_9] : memref<1x32xf32, #tpu.memory_space<vmem>>, vector<1x32xf32>
    %10 = vector.broadcast %9 : vector<1x32xf32> to vector<16x32xf32>
    %11 = arith.addf %8, %10 : vector<16x32xf32>
    %c0_10 = arith.constant 0 : index
    %c0_11 = arith.constant 0 : index
    %12 = vector.load %arg6[%c0_10, %c0_11] : memref<32x32xbf16, #tpu.memory_space<vmem>>, vector<32x32xbf16>
    %cst_12 = arith.constant dense<0.000000e+00> : vector<16x32xf32>
    %13 = tpu.matmul %6, %12, %cst_12 {dimension_numbers = #tpu.dot_dimension_numbers<[1], [0], [0], [1], [0, 0, 1, 1], [], []>} : vector<16x32xbf16>, vector<32x32xbf16>, vector<16x32xf32> -> vector<16x32xf32>
    %c0_13 = arith.constant 0 : index
    %c0_14 = arith.constant 0 : index
    %14 = vector.load %arg7[%c0_13, %c0_14] : memref<1x32xf32, #tpu.memory_space<vmem>>, vector<1x32xf32>
    %15 = vector.broadcast %14 : vector<1x32xf32> to vector<16x32xf32>
    %16 = arith.addf %13, %15 : vector<16x32xf32>
    %cst_15 = arith.constant 0.000000e+00 : f32
    %17 = vector.broadcast %cst_15 : f32 to vector<16x32xf32>
    %18 = arith.cmpf ogt, %11, %17 : vector<16x32xf32>
    %cst_16 = arith.constant 1.000000e+00 : f32
    %19 = vector.broadcast %cst_16 : f32 to vector<16x32xf32>
    %20 = arith.addf %11, %19 : vector<16x32xf32>
    %cst_17 = arith.constant 0.000000e+00 : f32
    %21 = vector.broadcast %cst_17 : f32 to vector<16x32xf32>
    %22 = arith.minimumf %11, %21 : vector<16x32xf32>
    %23 = math.exp %22 : vector<16x32xf32>
    %24 = arith.select %18, %20, %23 : vector<16x32xi1>, vector<16x32xf32>
    %c16_i32 = arith.constant 16 : i32
    %25 = arith.muli %arg1, %c16_i32 : i32
    %26 = tpu.iota {dimensions = array<i32: 0>} : vector<16x32xi32>
    %27 = vector.broadcast %25 : i32 to vector<16x32xi32>
    %28 = arith.addi %27, %26 : vector<16x32xi32>
    %c24_i32 = arith.constant 24 : i32
    %29 = vector.broadcast %c24_i32 : i32 to vector<16x32xi32>
    %30 = arith.cmpi slt, %28, %29 : vector<16x32xi32>
    %cst_18 = arith.constant 0.000000e+00 : f32
    %31 = vector.broadcast %cst_18 : f32 to vector<16x32xf32>
    %32 = arith.select %30, %24, %31 : vector<16x32xi1>, vector<16x32xf32>
    %c0_19 = arith.constant 0 : index
    %c0_20 = arith.constant 0 : index
    %33 = vector.load %arg11[%c0_19, %c0_20] : memref<1x32xf32, #tpu.memory_space<vmem>>, vector<1x32xf32>
    %cst_21 = arith.constant dense<0.000000e+00> : vector<32xf32>
    %34 = vector.multi_reduction <add>, %32, %cst_21 [0] : vector<16x32xf32> to vector<32xf32>
    %35 = vector.shape_cast %34 : vector<32xf32> to vector<1x32xf32>
    %36 = arith.addf %33, %35 : vector<1x32xf32>
    %c0_22 = arith.constant 0 : index
    %c0_23 = arith.constant 0 : index
    %37 = vector.load %arg11[%c0_22, %c0_23] : memref<1x32xf32, #tpu.memory_space<vmem>>, vector<1x32xf32>
    tpu.vector_store %arg11[%c0_22, %c0_23], %36 {strides = array<i32>} : memref<1x32xf32, #tpu.memory_space<vmem>>, vector<1x32xf32>,
    %38 = arith.truncf %32 : vector<16x32xf32> to vector<16x32xbf16>
    %39 = arith.truncf %16 : vector<16x32xf32> to vector<16x32xbf16>
    %cst_24 = arith.constant dense<0.000000e+00> : vector<32x32xf32>
    %40 = tpu.matmul %38, %39, %cst_24 {dimension_numbers = #tpu.dot_dimension_numbers<[0], [0], [1], [1], [0, 1, 1, 1], [], []>} : vector<16x32xbf16>, vector<16x32xbf16>, vector<32x32xf32> -> vector<32x32xf32>
    %c0_25 = arith.constant 0 : index
    %c0_26 = arith.constant 0 : index
    %41 = vector.load %arg12[%c0_25, %c0_26] : memref<32x8xf32, #tpu.memory_space<vmem>>, vector<8x8xf32>
    %42 = vector.extract_strided_slice %40 {offsets = [0, 0], sizes = [8, 8], strides = [1, 1]} : vector<32x32xf32> to vector<8x8xf32>
    %43 = arith.addf %41, %42 : vector<8x8xf32>
    %c0_27 = arith.constant 0 : index
    %c0_28 = arith.constant 0 : index
    %44 = vector.load %arg12[%c0_27, %c0_28] : memref<32x8xf32, #tpu.memory_space<vmem>>, vector<8x8xf32>
    tpu.vector_store %arg12[%c0_27, %c0_28], %43 {strides = array<i32>} : memref<32x8xf32, #tpu.memory_space<vmem>>, vector<8x8xf32>,
    %c8 = arith.constant 8 : index
    %c0_29 = arith.constant 0 : index
    %45 = vector.load %arg12[%c8, %c0_29] : memref<32x8xf32, #tpu.memory_space<vmem>>, vector<8x8xf32>
    %46 = vector.extract_strided_slice %40 {offsets = [8, 8], sizes = [8, 8], strides = [1, 1]} : vector<32x32xf32> to vector<8x8xf32>
    %47 = arith.addf %45, %46 : vector<8x8xf32>
    %c8_30 = arith.constant 8 : index
    %c0_31 = arith.constant 0 : index
    %48 = vector.load %arg12[%c8_30, %c0_31] : memref<32x8xf32, #tpu.memory_space<vmem>>, vector<8x8xf32>
    tpu.vector_store %arg12[%c8_30, %c0_31], %47 {strides = array<i32>} : memref<32x8xf32, #tpu.memory_space<vmem>>, vector<8x8xf32>,
    %c16 = arith.constant 16 : index
    %c0_32 = arith.constant 0 : index
    %49 = vector.load %arg12[%c16, %c0_32] : memref<32x8xf32, #tpu.memory_space<vmem>>, vector<8x8xf32>
    %50 = vector.extract_strided_slice %40 {offsets = [16, 16], sizes = [8, 8], strides = [1, 1]} : vector<32x32xf32> to vector<8x8xf32>
    %51 = arith.addf %49, %50 : vector<8x8xf32>
    %c16_33 = arith.constant 16 : index
    %c0_34 = arith.constant 0 : index
    %52 = vector.load %arg12[%c16_33, %c0_34] : memref<32x8xf32, #tpu.memory_space<vmem>>, vector<8x8xf32>
    tpu.vector_store %arg12[%c16_33, %c0_34], %51 {strides = array<i32>} : memref<32x8xf32, #tpu.memory_space<vmem>>, vector<8x8xf32>,
    %c24 = arith.constant 24 : index
    %c0_35 = arith.constant 0 : index
    %53 = vector.load %arg12[%c24, %c0_35] : memref<32x8xf32, #tpu.memory_space<vmem>>, vector<8x8xf32>
    %54 = vector.extract_strided_slice %40 {offsets = [24, 24], sizes = [8, 8], strides = [1, 1]} : vector<32x32xf32> to vector<8x8xf32>
    %55 = arith.addf %53, %54 : vector<8x8xf32>
    %c24_36 = arith.constant 24 : index
    %c0_37 = arith.constant 0 : index
    %56 = vector.load %arg12[%c24_36, %c0_37] : memref<32x8xf32, #tpu.memory_space<vmem>>, vector<8x8xf32>
    tpu.vector_store %arg12[%c24_36, %c0_37], %55 {strides = array<i32>} : memref<32x8xf32, #tpu.memory_space<vmem>>, vector<8x8xf32>,
    %c1_i32 = arith.constant 1 : i32
    %57 = arith.cmpi eq, %arg1, %c1_i32 : i32
    %58 = arith.extui %57 : i1 to i32
    %c0_i32_38 = arith.constant 0 : i32
    %59 = arith.cmpi ne, %58, %c0_i32_38 : i32
    scf.if %59 {
      %c0_39 = arith.constant 0 : index
      %c0_40 = arith.constant 0 : index
      %60 = vector.load %arg12[%c0_39, %c0_40] : memref<32x8xf32, #tpu.memory_space<vmem>>, vector<32x8xf32>
      %61 = arith.truncf %60 : vector<32x8xf32> to vector<32x8xbf16>
      %62 = vector.extract_strided_slice %61 {offsets = [0, 0], sizes = [8, 8], strides = [1, 1]} : vector<32x8xbf16> to vector<8x8xbf16>
      %c0_41 = arith.constant 0 : index
      %c0_42 = arith.constant 0 : index
      %63 = vector.load %arg8[%c0_41, %c0_42] : memref<32x32xbf16, #tpu.memory_space<vmem>>, vector<8x32xbf16>
      %cst_43 = arith.constant dense<0.000000e+00> : vector<8x32xf32>
      %64 = tpu.matmul %62, %63, %cst_43 {dimension_numbers = #tpu.dot_dimension_numbers<[1], [0], [0], [1], [0, 0, 1, 1], [], []>} : vector<8x8xbf16>, vector<8x32xbf16>, vector<8x32xf32> -> vector<8x32xf32>
      %65 = arith.truncf %64 : vector<8x32xf32> to vector<8x32xbf16>
      %c0_44 = arith.constant 0 : index
      %c0_45 = arith.constant 0 : index
      %c0_46 = arith.constant 0 : index
      %66 = vector.load %arg10[%c0_44, %c0_45, %c0_46] : memref<1x32x32xbf16, #tpu.memory_space<vmem>>, vector<1x8x32xbf16>
      %67 = vector.shape_cast %66 : vector<1x8x32xbf16> to vector<8x32xbf16>
      %68 = vector.shape_cast %65 : vector<8x32xbf16> to vector<1x8x32xbf16>
      tpu.vector_store %arg10[%c0_44, %c0_45, %c0_46], %68 {strides = array<i32>} : memref<1x32x32xbf16, #tpu.memory_space<vmem>>, vector<1x8x32xbf16>,
      %69 = vector.extract_strided_slice %61 {offsets = [8, 0], sizes = [8, 8], strides = [1, 1]} : vector<32x8xbf16> to vector<8x8xbf16>
      %c8_47 = arith.constant 8 : index
      %c0_48 = arith.constant 0 : index
      %70 = vector.load %arg8[%c8_47, %c0_48] : memref<32x32xbf16, #tpu.memory_space<vmem>>, vector<8x32xbf16>
      %cst_49 = arith.constant dense<0.000000e+00> : vector<8x32xf32>
      %71 = tpu.matmul %69, %70, %cst_49 {dimension_numbers = #tpu.dot_dimension_numbers<[1], [0], [0], [1], [0, 0, 1, 1], [], []>} : vector<8x8xbf16>, vector<8x32xbf16>, vector<8x32xf32> -> vector<8x32xf32>
      %72 = arith.truncf %71 : vector<8x32xf32> to vector<8x32xbf16>
      %c0_50 = arith.constant 0 : index
      %c8_51 = arith.constant 8 : index
      %c0_52 = arith.constant 0 : index
      %73 = vector.load %arg10[%c0_50, %c8_51, %c0_52] : memref<1x32x32xbf16, #tpu.memory_space<vmem>>, vector<1x8x32xbf16>
      %74 = vector.shape_cast %73 : vector<1x8x32xbf16> to vector<8x32xbf16>
      %75 = vector.shape_cast %72 : vector<8x32xbf16> to vector<1x8x32xbf16>
      tpu.vector_store %arg10[%c0_50, %c8_51, %c0_52], %75 {strides = array<i32>} : memref<1x32x32xbf16, #tpu.memory_space<vmem>>, vector<1x8x32xbf16>,
      %76 = vector.extract_strided_slice %61 {offsets = [16, 0], sizes = [8, 8], strides = [1, 1]} : vector<32x8xbf16> to vector<8x8xbf16>
      %c16_53 = arith.constant 16 : index
      %c0_54 = arith.constant 0 : index
      %77 = vector.load %arg8[%c16_53, %c0_54] : memref<32x32xbf16, #tpu.memory_space<vmem>>, vector<8x32xbf16>
      %cst_55 = arith.constant dense<0.000000e+00> : vector<8x32xf32>
      %78 = tpu.matmul %76, %77, %cst_55 {dimension_numbers = #tpu.dot_dimension_numbers<[1], [0], [0], [1], [0, 0, 1, 1], [], []>} : vector<8x8xbf16>, vector<8x32xbf16>, vector<8x32xf32> -> vector<8x32xf32>
      %79 = arith.truncf %78 : vector<8x32xf32> to vector<8x32xbf16>
      %c0_56 = arith.constant 0 : index
      %c16_57 = arith.constant 16 : index
      %c0_58 = arith.constant 0 : index
      %80 = vector.load %arg10[%c0_56, %c16_57, %c0_58] : memref<1x32x32xbf16, #tpu.memory_space<vmem>>, vector<1x8x32xbf16>
      %81 = vector.shape_cast %80 : vector<1x8x32xbf16> to vector<8x32xbf16>
      %82 = vector.shape_cast %79 : vector<8x32xbf16> to vector<1x8x32xbf16>
      tpu.vector_store %arg10[%c0_56, %c16_57, %c0_58], %82 {strides = array<i32>} : memref<1x32x32xbf16, #tpu.memory_space<vmem>>, vector<1x8x32xbf16>,
      %83 = vector.extract_strided_slice %61 {offsets = [24, 0], sizes = [8, 8], strides = [1, 1]} : vector<32x8xbf16> to vector<8x8xbf16>
      %c24_59 = arith.constant 24 : index
      %c0_60 = arith.constant 0 : index
      %84 = vector.load %arg8[%c24_59, %c0_60] : memref<32x32xbf16, #tpu.memory_space<vmem>>, vector<8x32xbf16>
      %cst_61 = arith.constant dense<0.000000e+00> : vector<8x32xf32>
      %85 = tpu.matmul %83, %84, %cst_61 {dimension_numbers = #tpu.dot_dimension_numbers<[1], [0], [0], [1], [0, 0, 1, 1], [], []>} : vector<8x8xbf16>, vector<8x32xbf16>, vector<8x32xf32> -> vector<8x32xf32>
      %86 = arith.truncf %85 : vector<8x32xf32> to vector<8x32xbf16>
      %c0_62 = arith.constant 0 : index
      %c24_63 = arith.constant 24 : index
      %c0_64 = arith.constant 0 : index
      %87 = vector.load %arg10[%c0_62, %c24_63, %c0_64] : memref<1x32x32xbf16, #tpu.memory_space<vmem>>, vector<1x8x32xbf16>
      %88 = vector.shape_cast %87 : vector<1x8x32xbf16> to vector<8x32xbf16>
      %89 = vector.shape_cast %86 : vector<8x32xbf16> to vector<1x8x32xbf16>
      tpu.vector_store %arg10[%c0_62, %c24_63, %c0_64], %89 {strides = array<i32>} : memref<1x32x32xbf16, #tpu.memory_space<vmem>>, vector<1x8x32xbf16>,
      %c0_65 = arith.constant 0 : index
      %c0_66 = arith.constant 0 : index
      %90 = vector.load %arg11[%c0_65, %c0_66] : memref<1x32xf32, #tpu.memory_space<vmem>>, vector<1x32xf32>
      %c0_67 = arith.constant 0 : index
      %c0_68 = arith.constant 0 : index
      %c0_69 = arith.constant 0 : index
      %91 = vector.load %arg9[%c0_67, %c0_68, %c0_69] : memref<1x1x32xf32, #tpu.memory_space<vmem>>, vector<1x1x32xf32>
      %92 = vector.shape_cast %91 : vector<1x1x32xf32> to vector<1x32xf32>
      %93 = vector.shape_cast %90 : vector<1x32xf32> to vector<1x1x32xf32>
      tpu.vector_store %arg9[%c0_67, %c0_68, %c0_69], %93 {strides = array<i32>} : memref<1x1x32xf32, #tpu.memory_space<vmem>>, vector<1x1x32xf32>,
    } else {
    }
    return
  }
  func.func @transform_0(%arg0: i32, %arg1: i32) -> (i32, i32, i32) {
    %c0_i32 = arith.constant 0 : i32
    %c0_i32_0 = arith.constant 0 : i32
    return %arg0, %arg1, %c0_i32 : i32, i32, i32
  }
  func.func @transform_1(%arg0: i32, %arg1: i32) -> (i32, i32, i32) {
    %c0_i32 = arith.constant 0 : i32
    %c0_i32_0 = arith.constant 0 : i32
    return %arg0, %arg1, %c0_i32 : i32, i32, i32
  }
  func.func @transform_2(%arg0: i32, %arg1: i32) -> (i32, i32) {
    %c0_i32 = arith.constant 0 : i32
    %c0_i32_0 = arith.constant 0 : i32
    %c0_i32_1 = arith.constant 0 : i32
    return %c0_i32, %c0_i32_0 : i32, i32
  }
  func.func @transform_3(%arg0: i32, %arg1: i32) -> (i32, i32) {
    %c0_i32 = arith.constant 0 : i32
    %c0_i32_0 = arith.constant 0 : i32
    %c0_i32_1 = arith.constant 0 : i32
    return %c0_i32, %c0_i32_0 : i32, i32
  }
  func.func @transform_4(%arg0: i32, %arg1: i32) -> (i32, i32) {
    %c0_i32 = arith.constant 0 : i32
    %c0_i32_0 = arith.constant 0 : i32
    %c0_i32_1 = arith.constant 0 : i32
    return %c0_i32, %c0_i32_0 : i32, i32
  }
  func.func @transform_5(%arg0: i32, %arg1: i32) -> (i32, i32) {
    %c0_i32 = arith.constant 0 : i32
    %c0_i32_0 = arith.constant 0 : i32
    %c0_i32_1 = arith.constant 0 : i32
    return %c0_i32, %c0_i32_0 : i32, i32
  }
  func.func @transform_6(%arg0: i32, %arg1: i32) -> (i32, i32) {
    %c0_i32 = arith.constant 0 : i32
    %c0_i32_0 = arith.constant 0 : i32
    %c0_i32_1 = arith.constant 0 : i32
    return %c0_i32, %c0_i32_0 : i32, i32
  }
  func.func @transform_7(%arg0: i32, %arg1: i32) -> (i32, i32, i32) {
    %c0_i32 = arith.constant 0 : i32
    %c0_i32_0 = arith.constant 0 : i32
    %c0_i32_1 = arith.constant 0 : i32
    return %arg0, %c0_i32, %c0_i32_0 : i32, i32, i32
  }
  func.func @transform_8(%arg0: i32, %arg1: i32) -> (i32, i32, i32) {
    %c0_i32 = arith.constant 0 : i32
    %c0_i32_0 = arith.constant 0 : i32
    %c0_i32_1 = arith.constant 0 : i32
    return %arg0, %c0_i32, %c0_i32_0 : i32, i32, i32
  }
}

</mosaic_0001>

<llo_original>
// kernel: tpu_custom_call.1
$region0: #{tpu_custom_call.1}
  #allocation0 [shape = 'u32[]', space=smem, size = 0x4, offset = 0x4, fixed_abs, tag = 'smem constant byte address 0x4 - core index']
  #allocation1 [shape = 'u32[144,128]{1,0:T(1,128)}', space=vmem, size = 0x12000, scoped, tag = 'internal scratch']
  #allocation2 [shape = 'f32[1,32]{1,0:T(1,128)}', space=vmem, size = 0x200, scoped, tag = 'scratch operand']
  #allocation3 [shape = 'f32[32,8]{1,0:T(8,128)}', space=vmem, size = 0x4000, scoped, tag = 'scratch operand']
  %s0 = inlined_call_operand.hbm [shape: bf16[2,32,32], index: 0, kind: input, shape index: {}]
  %s1 = inlined_call_operand.hbm [shape: bf16[2,32,32], index: 1, kind: input, shape index: {}]
  %s2 = inlined_call_operand.hbm [shape: bf16[32,32], index: 2, kind: input, shape index: {}]
  %s3 = inlined_call_operand.vmem [shape: f32[1,32], index: 3, kind: input, shape index: {}]
  %s4 = inlined_call_operand.hbm [shape: bf16[32,32], index: 4, kind: input, shape index: {}]
  %s5 = inlined_call_operand.vmem [shape: f32[1,32], index: 5, kind: input, shape index: {}]
  %s6 = inlined_call_operand.vmem [shape: bf16[32,32], index: 6, kind: input, shape index: {}]
  %s7 = inlined_call_operand.hbm [shape: f32[2,1,32], index: 7, kind: output, shape index: {0}]
  %s8 = inlined_call_operand.hbm [shape: bf16[2,32,32], index: 8, kind: output, shape index: {1}]
  %9 = xla_tuple %s7, %s8
  %s10 = sld [smem:[#allocation0]]
  $region93: #{tpu_custom_call.1} parent=0
    _
  %s12 = ssub.s32 1, %s10
  %s13 = scalar_select 0, %s12, %s10
  $region1: #{tpu_custom_call.1} parent=0
    #allocation4 [shape = 'u8[8192]{0}', space=vmem, size = 0x2000, scoped, tag = 'input window, operand 0']
    #allocation5 [shape = 's32[2]{0}', space=sflag, size = 0x8, scoped, tag = 'scoped memory for tpu_custom_call.1']
    #allocation6 [shape = 's32[2]{0}', space=sflag, size = 0x8, scoped, tag = 'scoped memory for tpu_custom_call.1']
    #allocation7 [shape = 'u8[8192]{0}', space=vmem, size = 0x2000, scoped, tag = 'input window, operand 1']
    #allocation8 [shape = 's32[2]{0}', space=sflag, size = 0x8, scoped, tag = 'scoped memory for tpu_custom_call.1']
    #allocation9 [shape = 'u8[8192]{0}', space=vmem, size = 0x2000, scoped, tag = 'input window, operand 2, single buffered']
    #allocation10 [shape = 'u8[8192]{0}', space=vmem, size = 0x2000, scoped, tag = 'input window, operand 4, single buffered']
    #allocation11 [shape = 's32[1]{0}', space=sflag, size = 0x4, scoped, tag = 'scoped memory for tpu_custom_call.1']
    #allocation12 [shape = 'u8[1024]{0}', space=vmem, size = 0x400, scoped, tag = 'output window, operand 0']
    #allocation13 [shape = 'u8[16384]{0}', space=vmem, size = 0x4000, scoped, tag = 'output window, operand 1']
    #allocation14 [shape = 's32[2]{0}', space=sflag, size = 0x8, scoped, tag = 'scoped memory for tpu_custom_call.1']
    %14 = vsyncpa [#allocation5], 0
    %s15 = scalar_lea.sflag [#allocation5], 1
    %16 = vsyncpa %s15, 0
    %17 = vsyncpa [#allocation8], 0
    %s18 = scalar_lea.sflag [#allocation8], 1
    %19 = vsyncpa %s18, 0
    %20 = vsyncpa [#allocation11], 0
    %21 = vsyncpa [#allocation6], 0
    %s22 = scalar_lea.sflag [#allocation6], 1
    %23 = vsyncpa %s22, 0
    %24 = vsyncpa [#allocation14], 0
    %s25 = scalar_lea.sflag [#allocation14], 1
    %26 = vsyncpa %s25, 0
    loop: start=0, step=1, limit=6
    $region2: #{tpu_custom_call.1} parent=1 // loop_pre_header
      _
    $region3: #{tpu_custom_call.1} parent=1 // loop_header
      %s28 = sphi 0, %s32
      %p29 = scmp.ge.s32.totalorder %s28, 6
      %s35 = sphi 0, %s47
      %s36 = sphi 0, %s43
      %s37 = sphi 0, %s35
      %s38 = sphi 0, %s36
      %s39 = sphi 0, %s37
      %s40 = sphi 0, %s38
      %s52 = sphi 0, %s54
      %s55 = sphi 0, %s52
      %s56 = sphi 0, %s55
      %s72 = sphi 0, %s56
      %s80 = sphi 0, %s82
      %s83 = sphi 0, %s80
      %s84 = sphi 0, %s83
      %s100 = sphi 0, %s84
      %s104 = sphi 0, %s104
      %s106 = sphi 0, %s104
      %s107 = sphi 0, %s106
      %s121 = sphi 0, %s107
      %s125 = sphi 0, %s125
      %s127 = sphi 0, %s125
      %s128 = sphi 0, %s127
      %s142 = sphi 0, %s128
      %s146 = sphi 0, %s146
      %s148 = sphi 0, %s146
      %s149 = sphi 0, %s148
      %s163 = sphi 0, %s149
      %s167 = sphi 0, %s167
      %s169 = sphi 0, %s167
      %s170 = sphi 0, %s169
      %s184 = sphi 0, %s170
      %s188 = sphi 0, %s188
      %s190 = sphi 0, %s188
      %s191 = sphi 0, %s190
      %s205 = sphi 0, %s191
      %s211 = sphi 0, %s213
      %s214 = sphi 0, %s211
      %s215 = sphi 0, %s214
      %s231 = sphi 0, %s215
      %s237 = sphi 0, %s239
      %s240 = sphi 0, %s237
      %s241 = sphi 0, %s240
      %s257 = sphi 0, %s241
    $region4: #{tpu_custom_call.1} parent=1 // loop_header_branch
      %31 = sbr.rel (%p29) target = $region8
    $region5: #{tpu_custom_call.1} parent=1 // loop_body
      %s33 = ssub.s32 %s28, 1
      %s34 = ssub.s32 %s28, 2
      %s41 = sadd.s32 1, %s36
      %p42 = scmp.ge.s32.totalorder %s41, 2
      %s43 = scalar_select %p42, 0, %s41
      %s44 = sadd.s32 1, %s35
      %s45 = scalar_select %p42, %s44, %s35
      %p46 = scmp.ge.s32.totalorder %s45, 2
      %s47 = scalar_select %p46, 0, %s45
      %s48 = ssub.s32 %s35, %s47
      %s49 = ssub.s32 %s36, %s43
      %s50 = sor.u32 %s48, %s49
      %p51 = scmp.eq.s32.totalorder %s50, 0
      %s53 = sadd.s32 %s52, 1
      %s54 = scalar_select %p51, %s52, %s53
      %p57 = pneg %p51
      %p58 = scmp.eq.s32.totalorder %s28, 3
      %p59 = por %p57, %p58
      %p60 = scmp.ne.s32.totalorder %s52, %s55
      %p61 = scmp.eq.s32.totalorder %s28, 0
      %p62 = por %p60, %p61
      %p63 = scmp.ne.s32.totalorder %s52, %s55
      %p64 = scmp.eq.s32.totalorder %s33, 3
      %p65 = por %p63, %p64
      %p66 = scmp.ne.s32.totalorder %s55, %s56
      %p67 = scmp.eq.s32.totalorder %s33, 0
      %p68 = por %p66, %p67
      %p69 = scmp.ne.s32.totalorder %s55, %s56
      %p70 = scmp.eq.s32.totalorder %s34, 3
      %p71 = por %p69, %p70
      %p73 = scmp.ne.s32.totalorder %s56, %s72
      %p74 = scmp.eq.s32.totalorder %s34, 0
      %p75 = por %p73, %p74
      %s76 = ssub.s32 %s35, %s47
      %s77 = ssub.s32 %s36, %s43
      %s78 = sor.u32 %s76, %s77
      %p79 = scmp.eq.s32.totalorder %s78, 0
      %s81 = sadd.s32 %s80, 1
      %s82 = scalar_select %p79, %s80, %s81
      %p85 = pneg %p79
      %p86 = scmp.eq.s32.totalorder %s28, 3
      %p87 = por %p85, %p86
      %p88 = scmp.ne.s32.totalorder %s80, %s83
      %p89 = scmp.eq.s32.totalorder %s28, 0
      %p90 = por %p88, %p89
      %p91 = scmp.ne.s32.totalorder %s80, %s83
      %p92 = scmp.eq.s32.totalorder %s33, 3
      %p93 = por %p91, %p92
      %p94 = scmp.ne.s32.totalorder %s83, %s84
      %p95 = scmp.eq.s32.totalorder %s33, 0
      %p96 = por %p94, %p95
      %p97 = scmp.ne.s32.totalorder %s83, %s84
      %p98 = scmp.eq.s32.totalorder %s34, 3
      %p99 = por %p97, %p98
      %p101 = scmp.ne.s32.totalorder %s84, %s100
      %p102 = scmp.eq.s32.totalorder %s34, 0
      %p103 = por %p101, %p102
      %s105 = sadd.s32 %s104, 1
      %p108 = scmp.eq.s32.totalorder %s28, 3
      %p109 = scmp.ne.s32.totalorder %s104, %s106
      %p110 = scmp.eq.s32.totalorder %s28, 0
      %p111 = por %p109, %p110
      %p112 = scmp.ne.s32.totalorder %s104, %s106
      %p113 = scmp.eq.s32.totalorder %s33, 3
      %p114 = por %p112, %p113
      %p115 = scmp.ne.s32.totalorder %s106, %s107
      %p116 = scmp.eq.s32.totalorder %s33, 0
      %p117 = por %p115, %p116
      %p118 = scmp.ne.s32.totalorder %s106, %s107
      %p119 = scmp.eq.s32.totalorder %s34, 3
      %p120 = por %p118, %p119
      %p122 = scmp.ne.s32.totalorder %s107, %s121
      %p123 = scmp.eq.s32.totalorder %s34, 0
      %p124 = por %p122, %p123
      %s126 = sadd.s32 %s125, 1
      %p129 = scmp.eq.s32.totalorder %s28, 3
      %p130 = scmp.ne.s32.totalorder %s125, %s127
      %p131 = scmp.eq.s32.totalorder %s28, 0
      %p132 = por %p130, %p131
      %p133 = scmp.ne.s32.totalorder %s125, %s127
      %p134 = scmp.eq.s32.totalorder %s33, 3
      %p135 = por %p133, %p134
      %p136 = scmp.ne.s32.totalorder %s127, %s128
      %p137 = scmp.eq.s32.totalorder %s33, 0
      %p138 = por %p136, %p137
      %p139 = scmp.ne.s32.totalorder %s127, %s128
      %p140 = scmp.eq.s32.totalorder %s34, 3
      %p141 = por %p139, %p140
      %p143 = scmp.ne.s32.totalorder %s128, %s142
      %p144 = scmp.eq.s32.totalorder %s34, 0
      %p145 = por %p143, %p144
      %s147 = sadd.s32 %s146, 1
      %p150 = scmp.eq.s32.totalorder %s28, 3
      %p151 = scmp.ne.s32.totalorder %s146, %s148
      %p152 = scmp.eq.s32.totalorder %s28, 0
      %p153 = por %p151, %p152
      %p154 = scmp.ne.s32.totalorder %s146, %s148
      %p155 = scmp.eq.s32.totalorder %s33, 3
      %p156 = por %p154, %p155
      %p157 = scmp.ne.s32.totalorder %s148, %s149
      %p158 = scmp.eq.s32.totalorder %s33, 0
      %p159 = por %p157, %p158
      %p160 = scmp.ne.s32.totalorder %s148, %s149
      %p161 = scmp.eq.s32.totalorder %s34, 3
      %p162 = por %p160, %p161
      %p164 = scmp.ne.s32.totalorder %s149, %s163
      %p165 = scmp.eq.s32.totalorder %s34, 0
      %p166 = por %p164, %p165
      %s168 = sadd.s32 %s167, 1
      %p171 = scmp.eq.s32.totalorder %s28, 3
      %p172 = scmp.ne.s32.totalorder %s167, %s169
      %p173 = scmp.eq.s32.totalorder %s28, 0
      %p174 = por %p172, %p173
      %p175 = scmp.ne.s32.totalorder %s167, %s169
      %p176 = scmp.eq.s32.totalorder %s33, 3
      %p177 = por %p175, %p176
      %p178 = scmp.ne.s32.totalorder %s169, %s170
      %p179 = scmp.eq.s32.totalorder %s33, 0
      %p180 = por %p178, %p179
      %p181 = scmp.ne.s32.totalorder %s169, %s170
      %p182 = scmp.eq.s32.totalorder %s34, 3
      %p183 = por %p181, %p182
      %p185 = scmp.ne.s32.totalorder %s170, %s184
      %p186 = scmp.eq.s32.totalorder %s34, 0
      %p187 = por %p185, %p186
      %s189 = sadd.s32 %s188, 1
      %p192 = scmp.eq.s32.totalorder %s28, 3
      %p193 = scmp.ne.s32.totalorder %s188, %s190
      %p194 = scmp.eq.s32.totalorder %s28, 0
      %p195 = por %p193, %p194
      %p196 = scmp.ne.s32.totalorder %s188, %s190
      %p197 = scmp.eq.s32.totalorder %s33, 3
      %p198 = por %p196, %p197
      %p199 = scmp.ne.s32.totalorder %s190, %s191
      %p200 = scmp.eq.s32.totalorder %s33, 0
      %p201 = por %p199, %p200
      %p202 = scmp.ne.s32.totalorder %s190, %s191
      %p203 = scmp.eq.s32.totalorder %s34, 3
      %p204 = por %p202, %p203
      %p206 = scmp.ne.s32.totalorder %s191, %s205
      %p207 = scmp.eq.s32.totalorder %s34, 0
      %p208 = por %p206, %p207
      %s209 = ssub.s32 %s35, %s47
      %p210 = scmp.eq.s32.totalorder %s209, 0
      %s212 = sadd.s32 %s211, 1
      %s213 = scalar_select %p210, %s211, %s212
      %p216 = pneg %p210
      %p217 = scmp.eq.s32.totalorder %s28, 3
      %p218 = por %p216, %p217
      %p219 = scmp.ne.s32.totalorder %s211, %s214
      %p220 = scmp.eq.s32.totalorder %s28, 0
      %p221 = por %p219, %p220
      %p222 = scmp.ne.s32.totalorder %s211, %s214
      %p223 = scmp.eq.s32.totalorder %s33, 3
      %p224 = por %p222, %p223
      %p225 = scmp.ne.s32.totalorder %s214, %s215
      %p226 = scmp.eq.s32.totalorder %s33, 0
      %p227 = por %p225, %p226
      %p228 = scmp.ne.s32.totalorder %s214, %s215
      %p229 = scmp.eq.s32.totalorder %s34, 3
      %p230 = por %p228, %p229
      %p232 = scmp.ne.s32.totalorder %s215, %s231
      %p233 = scmp.eq.s32.totalorder %s34, 0
      %p234 = por %p232, %p233
      %s235 = ssub.s32 %s35, %s47
      %p236 = scmp.eq.s32.totalorder %s235, 0
      %s238 = sadd.s32 %s237, 1
      %s239 = scalar_select %p236, %s237, %s238
      %p242 = pneg %p236
      %p243 = scmp.eq.s32.totalorder %s28, 3
      %p244 = por %p242, %p243
      %p245 = scmp.ne.s32.totalorder %s237, %s240
      %p246 = scmp.eq.s32.totalorder %s28, 0
      %p247 = por %p245, %p246
      %p248 = scmp.ne.s32.totalorder %s237, %s240
      %p249 = scmp.eq.s32.totalorder %s33, 3
      %p250 = por %p248, %p249
      %p251 = scmp.ne.s32.totalorder %s240, %s241
      %p252 = scmp.eq.s32.totalorder %s33, 0
      %p253 = por %p251, %p252
      %p254 = scmp.ne.s32.totalorder %s240, %s241
      %p255 = scmp.eq.s32.totalorder %s34, 3
      %p256 = por %p254, %p255
      %p258 = scmp.ne.s32.totalorder %s241, %s257
      %p259 = scmp.eq.s32.totalorder %s34, 0
      %p260 = por %p258, %p259
      %p261 = scmp.le.s32.totalorder 1, %s28
      %p262 = scmp.lt.s32.totalorder %s28, 5
      %p263 = pnand %p261, %p262
      %p264 = pneg %p263
      // Predicated region
      $region9: #{tpu_custom_call.1} parent=5 // pred_check
        _
      $region10: #{tpu_custom_call.1} parent=5 // pred_check_branch
        %266 = sbr.rel (%p263) target = $region12
      $region11: #{tpu_custom_call.1} parent=5 // pred_region
        %s267 = ssub.s32 %s28, 1
        // Predicated region
        $region13: #{tpu_custom_call.1} parent=11 // pred_check
          %p268 = pneg %p117
        $region14: #{tpu_custom_call.1} parent=11 // pred_check_branch
          %270 = sbr.rel (%p268) target = $region16
        $region15: #{tpu_custom_call.1} parent=11 // pred_region
          %s272 = ssub.s32 256, 256
          %273 = vsyncadd [#allocation8], %s272
          %s274 = sshll.u32 [#allocation9], 4
          %s275 = int_to_ptr.vmem [resolvable:$true] %s274
          %280 = dma.hbm_to_vmem [thread:$0]  %s2, 256, %s275, [#allocation8], 64, 64, 4
        $region16: #{tpu_custom_call.1} parent=11 // pred_fallthru
          _
        // Predicated region
        $region17: #{tpu_custom_call.1} parent=11 // pred_check
          %p281 = pneg %p138
        $region18: #{tpu_custom_call.1} parent=11 // pred_check_branch
          %283 = sbr.rel (%p281) target = $region20
        $region19: #{tpu_custom_call.1} parent=11 // pred_region
          _
        $region20: #{tpu_custom_call.1} parent=11 // pred_fallthru
          _
        // Predicated region
        $region21: #{tpu_custom_call.1} parent=11 // pred_check
          %p284 = pneg %p159
        $region22: #{tpu_custom_call.1} parent=11 // pred_check_branch
          %286 = sbr.rel (%p284) target = $region24
        $region23: #{tpu_custom_call.1} parent=11 // pred_region
          %s288 = ssub.s32 256, 256
          %289 = vsyncadd [#allocation11], %s288
          %s290 = sshll.u32 [#allocation10], 4
          %s291 = int_to_ptr.vmem [resolvable:$true] %s290
          %296 = dma.hbm_to_vmem [thread:$0]  %s4, 256, %s291, [#allocation11], 64, 64, 4
        $region24: #{tpu_custom_call.1} parent=11 // pred_fallthru
          _
        // Predicated region
        $region25: #{tpu_custom_call.1} parent=11 // pred_check
          %p297 = pneg %p180
        $region26: #{tpu_custom_call.1} parent=11 // pred_check_branch
          %299 = sbr.rel (%p297) target = $region28
        $region27: #{tpu_custom_call.1} parent=11 // pred_region
          _
        $region28: #{tpu_custom_call.1} parent=11 // pred_fallthru
          _
        // Predicated region
        $region29: #{tpu_custom_call.1} parent=11 // pred_check
          %p300 = pneg %p201
        $region30: #{tpu_custom_call.1} parent=11 // pred_check_branch
          %302 = sbr.rel (%p300) target = $region32
        $region31: #{tpu_custom_call.1} parent=11 // pred_region
          _
        $region32: #{tpu_custom_call.1} parent=11 // pred_fallthru
          _
      $region12: #{tpu_custom_call.1} parent=5 // pred_fallthru
        _
      %p303 = scmp.lt.s32.totalorder %s28, 4
      // Predicated region
      $region33: #{tpu_custom_call.1} parent=5 // pred_check
        %p304 = pneg %p303
      $region34: #{tpu_custom_call.1} parent=5 // pred_check_branch
        %306 = sbr.rel (%p304) target = $region36
      $region35: #{tpu_custom_call.1} parent=5 // pred_region
        // Predicated region
        $region37: #{tpu_custom_call.1} parent=35 // pred_check
          %p307 = pneg %p62
        $region38: #{tpu_custom_call.1} parent=35 // pred_check_branch
          %309 = sbr.rel (%p307) target = $region40
        $region39: #{tpu_custom_call.1} parent=35 // pred_region
          %s310 = sand.u32 %s52, 1
          %s311 = scalar_lea.sflag [#allocation5], %s310
          %s312 = sand.u32 %s52, 1
          %s313 = smul.addr %s312, 8
          %s314 = scalar_lea.vmem [#allocation4], %s313
          %s315 = smul.u32 2, %s36
          %s317 = ssub.s32 128, 128
          %318 = vsyncadd %s311, %s317
          %s319 = smul.addr %s35, 4
          %s320 = sadd.s32 %s315, %s319
          %s321 = smul.addr %s320, 64
          %s322 = scalar_lea.hbm %s0, %s321
          %s323 = sshll.u32 %s314, 4
          %s324 = int_to_ptr.vmem [resolvable:$true] %s323
          %329 = dma.hbm_to_vmem [thread:$0]  %s322, 128, %s324, %s311, 64, 64, 4
        $region40: #{tpu_custom_call.1} parent=35 // pred_fallthru
          _
        // Predicated region
        $region41: #{tpu_custom_call.1} parent=35 // pred_check
          %p330 = pneg %p90
        $region42: #{tpu_custom_call.1} parent=35 // pred_check_branch
          %332 = sbr.rel (%p330) target = $region44
        $region43: #{tpu_custom_call.1} parent=35 // pred_region
          %s333 = sand.u32 %s28, 1
          %s334 = scalar_lea.sflag [#allocation8], %s333
          %s335 = sand.u32 %s80, 1
          %s336 = smul.addr %s335, 8
          %s337 = scalar_lea.vmem [#allocation7], %s336
          %s338 = smul.u32 2, %s36
          %s340 = ssub.s32 128, 128
          %341 = vsyncadd %s334, %s340
          %s342 = smul.addr %s35, 4
          %s343 = sadd.s32 %s338, %s342
          %s344 = smul.addr %s343, 64
          %s345 = scalar_lea.hbm %s1, %s344
          %s346 = sshll.u32 %s337, 4
          %s347 = int_to_ptr.vmem [resolvable:$true] %s346
          %352 = dma.hbm_to_vmem [thread:$0]  %s345, 128, %s347, %s334, 64, 64, 4
        $region44: #{tpu_custom_call.1} parent=35 // pred_fallthru
          _
      $region36: #{tpu_custom_call.1} parent=5 // pred_fallthru
        _
      %p353 = scmp.le.s32.totalorder 1, %s28
      %p354 = scmp.lt.s32.totalorder %s28, 5
      %p355 = pnand %p353, %p354
      %p356 = pneg %p355
      // Predicated region
      $region45: #{tpu_custom_call.1} parent=5 // pred_check
        _
      $region46: #{tpu_custom_call.1} parent=5 // pred_check_branch
        %358 = sbr.rel (%p355) target = $region48
      $region47: #{tpu_custom_call.1} parent=5 // pred_region
        %s359 = ssub.s32 %s28, 1
        %s360 = sand.u32 %s55, 1
        %s361 = scalar_lea.sflag [#allocation5], %s360
        %s362 = sand.u32 %s55, 1
        %s363 = smul.addr %s362, 8
        %s364 = scalar_lea.vmem [#allocation4], %s363
        // Predicated region
        $region49: #{tpu_custom_call.1} parent=47 // pred_check
          %p365 = pneg %p68
        $region50: #{tpu_custom_call.1} parent=47 // pred_check_branch
          %367 = sbr.rel (%p365) target = $region52
        $region51: #{tpu_custom_call.1} parent=47 // pred_region
          %368 = dma.done %s361, 128
        $region52: #{tpu_custom_call.1} parent=47 // pred_fallthru
          _
        %s369 = sand.u32 %s33, 1
        %s370 = scalar_lea.sflag [#allocation8], %s369
        %s371 = sand.u32 %s83, 1
        %s372 = smul.addr %s371, 8
        %s373 = scalar_lea.vmem [#allocation7], %s372
        // Predicated region
        $region53: #{tpu_custom_call.1} parent=47 // pred_check
          %p374 = pneg %p96
        $region54: #{tpu_custom_call.1} parent=47 // pred_check_branch
          %376 = sbr.rel (%p374) target = $region56
        $region55: #{tpu_custom_call.1} parent=47 // pred_region
          %377 = dma.done %s370, 128
        $region56: #{tpu_custom_call.1} parent=47 // pred_fallthru
          _
        // Predicated region
        $region57: #{tpu_custom_call.1} parent=47 // pred_check
          %p378 = pneg %p117
        $region58: #{tpu_custom_call.1} parent=47 // pred_check_branch
          %380 = sbr.rel (%p378) target = $region60
        $region59: #{tpu_custom_call.1} parent=47 // pred_region
          %381 = dma.done [#allocation8], 256
        $region60: #{tpu_custom_call.1} parent=47 // pred_fallthru
          _
        // Predicated region
        $region61: #{tpu_custom_call.1} parent=47 // pred_check
          %p382 = pneg %p159
        $region62: #{tpu_custom_call.1} parent=47 // pred_check_branch
          %384 = sbr.rel (%p382) target = $region64
        $region63: #{tpu_custom_call.1} parent=47 // pred_region
          %385 = dma.done [#allocation11], 256
        $region64: #{tpu_custom_call.1} parent=47 // pred_fallthru
          _
        %s386 = sand.u32 %s55, 1
        %s387 = scalar_lea.sflag [#allocation5], %s386
        %s388 = sand.u32 %s55, 1
        %s389 = smul.addr %s388, 8
        %s390 = scalar_lea.vmem [#allocation4], %s389
        %p391 = pneg %p68
        %p392 = pneg %p65
        %s393 = sand.u32 %s33, 1
        %s394 = scalar_lea.sflag [#allocation8], %s393
        %s395 = sand.u32 %s83, 1
        %s396 = smul.addr %s395, 8
        %s397 = scalar_lea.vmem [#allocation7], %s396
        %p398 = pneg %p96
        %p399 = pneg %p93
        %p400 = pneg %p117
        %p401 = pneg %p114
        %p402 = pneg %p138
        %p403 = pneg %p135
        %p404 = pneg %p159
        %p405 = pneg %p156
        %p406 = pneg %p180
        %p407 = pneg %p177
        %p408 = pneg %p201
        %p409 = pneg %p198
        %p410 = pneg %p227
        %p411 = pneg %p224
        %s412 = sand.u32 %s214, 1
        %s413 = scalar_lea.sflag [#allocation6], %s412
        %s414 = sand.u32 %s214, 1
        %s415 = scalar_lea.vmem [#allocation12], %s414
        %p416 = pneg %p253
        %p417 = pneg %p250
        %s418 = sand.u32 %s240, 1
        %s419 = scalar_lea.sflag [#allocation14], %s418
        %s420 = sand.u32 %s240, 1
        %s421 = smul.addr %s420, 16
        %s422 = scalar_lea.vmem [#allocation13], %s421
        %s423 = smul.u32 2, %s38
        %s424 = smul.u32 2, %s38
        %p426 = scmp.eq.s32.totalorder %s38, 0
        // Predicated region
        $region65: #{tpu_custom_call.1} parent=47 // pred_check
          %p427 = pneg %p426
        $region66: #{tpu_custom_call.1} parent=47 // pred_check_branch
          %429 = sbr.rel (%p427) target = $region68
        $region67: #{tpu_custom_call.1} parent=47 // pred_region
          %vm430 = vcmask 253952
          %431 = vst.msk [vmem:[#allocation2] sm:$0x1] %vm430, 0.0
          %vm432 = vcmask 64512
          %433 = vst.msk [vmem:[#allocation3] sm:$0xff] %vm432, 0.0
          %434 = vst.msk [vmem:[#allocation3 + $0x8] sm:$0xff] %vm432, 0.0
          %435 = vst.msk [vmem:[#allocation3 + $0x10] sm:$0xff] %vm432, 0.0
          %436 = vst.msk [vmem:[#allocation3 + $0x18] sm:$0xff] %vm432, 0.0
        $region68: #{tpu_custom_call.1} parent=47 // pred_fallthru
          _
        %v437 = vld [vmem:[%s364] sm:$0xf]
        %v438 = vld [vmem:[%s364 + $0x4] sm:$0xf]
        %v439 = vld [vmem:[%s373] sm:$0xf]
        %v440 = vld [vmem:[%s373 + $0x4] sm:$0xf]
        %v441 = vld [vmem:[#allocation9] sm:$0xf]
        %v442 = vld [vmem:[#allocation9 + $0x4] sm:$0xf]
        %v443 = vld [vmem:[#allocation9 + $0x8] sm:$0xf]
        %v444 = vld [vmem:[#allocation9 + $0xc] sm:$0xf]
        %v445 = vld [vmem:[%s3] sm:$0x1]
        %v447 = vlaneseq
        %v448 = vshrl.u32 %v447, 7
        %v449 = vsub.s32 0, %v448
        %v450 = vrot.slane %v445, %v449
        %v454 = vunpack.c.l.b16 %v437
        %v455 = vunpack.c.l.b16 %v438
        %v456 = vpack.c.b16 %v455, %v454
        %v461 = vunpack.c.l.b16 %v441
        %v462 = vunpack.c.l.b16 %v442
        %v463 = vunpack.c.l.b16 %v443
        %v464 = vunpack.c.l.b16 %v444
        %v465 = vpack.c.b16 %v462, %v461
        %v466 = vpack.c.b16 %v464, %v463
        %vm469 = vcmask 261120
        %v471 = vsel %vm469, %v456, 0
        %473 = vmatprep.subr.bf16.mxu0 0
        %474 = vmatpush1.bf16.msra.mxu0 %v465
        %475 = vmatprep.subr.bf16.mxu0 0
        %476 = vmatpush1.bf16.msra.mxu0 %v466
        %477 = vmatprep.subr.bf16.mxu0 0
        %478 = vmatpush1.bf16.msra.mxu0 0
        %479 = vmatprep.subr.bf16.mxu0 0
        %480 = vmatpush1.bf16.msra.mxu0 0
        %481 = vmatprep.subr.bf16.mxu0 0
        %482 = vmatpush1.bf16.msra.mxu0 0
        %483 = vmatprep.subr.bf16.mxu0 0
        %484 = vmatpush1.bf16.msra.mxu0 0
        %485 = vmatprep.subr.bf16.mxu0 0
        %486 = vmatpush1.bf16.msra.mxu0 0
        %487 = vmatprep.subr.bf16.mxu0 0
        %488 = vmatpush1.bf16.msra.mxu0 0
        %489 = vmatprep.subr.bf16.mxu0 0
        %490 = vmatpush1.bf16.msra.mxu0 0
        %491 = vmatprep.subr.bf16.mxu0 0
        %492 = vmatpush1.bf16.msra.mxu0 0
        %493 = vmatprep.subr.bf16.mxu0 0
        %494 = vmatpush1.bf16.msra.mxu0 0
        %495 = vmatprep.subr.bf16.mxu0 0
        %496 = vmatpush1.bf16.msra.mxu0 0
        %497 = vmatprep.subr.bf16.mxu0 0
        %498 = vmatpush1.bf16.msra.mxu0 0
        %499 = vmatprep.subr.bf16.mxu0 0
        %500 = vmatpush1.bf16.msra.mxu0 0
        %501 = vmatprep.subr.bf16.mxu0 0
        %502 = vmatpush1.bf16.msra.mxu0 0
        %503 = vmatprep.subr.bf16.mxu0 0
        %504 = vmatpush1.bf16.msra.mxu0 0
        %505 = vmatprep.mubr.bf16.mxu0 0
        %506 = vmatmul.mubr.bf16.gmra.mrb[0].mxu0 %v471
        %v507 = vpop.f32.mrb[0].mxu0
        %v508 = vadd.f32 %v450, %v507
        %v509 = vpop.f32.mrb[0].mxu0
        %v510 = vpop.f32.mrb[0].mxu0
        %v511 = vadd.f32 %v450, %v510
        %v512 = vpop.f32.mrb[0].mxu0
        %513 = vdwg.mxu0
        %v514 = vld [vmem:[#allocation10] sm:$0xf]
        %v515 = vld [vmem:[#allocation10 + $0x4] sm:$0xf]
        %v516 = vld [vmem:[#allocation10 + $0x8] sm:$0xf]
        %v517 = vld [vmem:[#allocation10 + $0xc] sm:$0xf]
        %v518 = vld [vmem:[%s5] sm:$0x1]
        %v520 = vlaneseq
        %v521 = vshrl.u32 %v520, 7
        %v522 = vsub.s32 0, %v521
        %v523 = vrot.slane %v518, %v522
        %v527 = vunpack.c.l.b16 %v439
        %v528 = vunpack.c.l.b16 %v440
        %v529 = vpack.c.b16 %v528, %v527
        %v534 = vunpack.c.l.b16 %v514
        %v535 = vunpack.c.l.b16 %v515
        %v536 = vunpack.c.l.b16 %v516
        %v537 = vunpack.c.l.b16 %v517
        %v538 = vpack.c.b16 %v535, %v534
        %v539 = vpack.c.b16 %v537, %v536
        %v543 = vsel %vm469, %v529, 0
        %545 = vmatprep.subr.bf16.mxu0 0
        %546 = vmatpush1.bf16.msra.mxu0 %v538
        %547 = vmatprep.subr.bf16.mxu0 0
        %548 = vmatpush1.bf16.msra.mxu0 %v539
        %549 = vmatprep.subr.bf16.mxu0 0
        %550 = vmatpush1.bf16.msra.mxu0 0
        %551 = vmatprep.subr.bf16.mxu0 0
        %552 = vmatpush1.bf16.msra.mxu0 0
        %553 = vmatprep.subr.bf16.mxu0 0
        %554 = vmatpush1.bf16.msra.mxu0 0
        %555 = vmatprep.subr.bf16.mxu0 0
        %556 = vmatpush1.bf16.msra.mxu0 0
        %557 = vmatprep.subr.bf16.mxu0 0
        %558 = vmatpush1.bf16.msra.mxu0 0
        %559 = vmatprep.subr.bf16.mxu0 0
        %560 = vmatpush1.bf16.msra.mxu0 0
        %561 = vmatprep.subr.bf16.mxu0 0
        %562 = vmatpush1.bf16.msra.mxu0 0
        %563 = vmatprep.subr.bf16.mxu0 0
        %564 = vmatpush1.bf16.msra.mxu0 0
        %565 = vmatprep.subr.bf16.mxu0 0
        %566 = vmatpush1.bf16.msra.mxu0 0
        %567 = vmatprep.subr.bf16.mxu0 0
        %568 = vmatpush1.bf16.msra.mxu0 0
        %569 = vmatprep.subr.bf16.mxu0 0
        %570 = vmatpush1.bf16.msra.mxu0 0
        %571 = vmatprep.subr.bf16.mxu0 0
        %572 = vmatpush1.bf16.msra.mxu0 0
        %573 = vmatprep.subr.bf16.mxu0 0
        %574 = vmatpush1.bf16.msra.mxu0 0
        %575 = vmatprep.subr.bf16.mxu0 0
        %576 = vmatpush1.bf16.msra.mxu0 0
        %577 = vmatprep.mubr.bf16.mxu0 0
        %578 = vmatmul.mubr.bf16.gmra.mrb[0].mxu0 %v543
        %v579 = vpop.f32.mrb[0].mxu0
        %v580 = vadd.f32 %v523, %v579
        %v581 = vpop.f32.mrb[0].mxu0
        %v582 = vpop.f32.mrb[0].mxu0
        %v583 = vadd.f32 %v523, %v582
        %v584 = vpop.f32.mrb[0].mxu0
        %585 = vdwg.mxu0
        %vm586 = vcmp.gt.f32.partialorder %v508, 0.0
        %vm587 = vcmp.gt.f32.partialorder %v511, 0.0
        %v588 = vadd.f32 %v508, 1.0
        %v589 = vadd.f32 %v511, 1.0
        %v590 = vmin.f32 %v508, 0.0
        %v591 = vmin.f32 %v511, 0.0
        %v592 = vmul.f32 %v590, 1.442695
        %v593 = vpow.pop %v592
        %v594 = vmul.f32 %v591, 1.442695
        %v595 = vpow.pop %v594
        %v596 = vsel %vm586, %v588, %v593
        %v597 = vsel %vm587, %v589, %v595
        %s598 = smul.u32 %s38, 16
        %v599 = vlaneseq
        %v600 = vshrl.u32 %v599, 7
        %v601 = vadd.s32 %v600, 8
        %v602 = vstv %s598
        %v603 = vadd.s32 %v602, %v600
        %v604 = vadd.s32 %v602, %v601
        %vm605 = vcmp.lt.s32.totalorder %v603, 24
        %vm606 = vcmp.lt.s32.totalorder %v604, 24
        %v607 = vsel %vm605, %v596, 0.0
        %v608 = vsel %vm606, %v597, 0.0
        %v609 = vld [vmem:[#allocation2] sm:$0x1]
        %v610 = vsel %vm469, %v607, 0.0
        %v611 = vsel %vm469, %v608, 0.0
        %v612 = vadd.f32 %v610, %v611
        %v613 = vrot.slane %v612, 4
        %v614 = vadd.f32 %v612, %v613
        %v615 = vrot.slane %v614, 2
        %v616 = vadd.f32 %v614, %v615
        %v617 = vrot.slane %v616, 1
        %v618 = vadd.f32 %v616, %v617
        %v619 = vadd.f32 %v609, %v618
        %vm620 = vcmask 253952
        %621 = vst.msk [vmem:[#allocation2] sm:$0x1] %vm620, %v619
        %v622 = vpack.c.bf16 %v608, %v607
        %v623 = vpack.c.bf16 %v583, %v580
        %624 = vxpose.xlu0.c.b16.start [1/8] %v622, 128
        %625 = vxpose.xlu0.c.b16.cont [2/8] 0, 128
        %626 = vxpose.xlu0.c.b16.cont [3/8] 0, 128
        %627 = vxpose.xlu0.c.b16.cont [4/8] 0, 128
        %628 = vxpose.xlu0.c.b16.cont [5/8] 0, 128
        %629 = vxpose.xlu0.c.b16.cont [6/8] 0, 128
        %630 = vxpose.xlu0.c.b16.cont [7/8] 0, 128
        %631 = vxpose.xlu0.c.b16.end [8/8] 0, 128
        %v632 = vpop.trf.xlu0
        %v633 = vpop.trf.xlu0
        %v634 = vpop.trf.xlu0
        %v635 = vpop.trf.xlu0
        %v636 = vpop.trf.xlu0
        %v637 = vpop.trf.xlu0
        %v638 = vpop.trf.xlu0
        %v639 = vpop.trf.xlu0
        %vm640 = vcmask 130048
        %v642 = vsel %vm640, %v632, 0
        %v645 = vsel %vm640, %v633, 0
        %647 = vmatprep.subr.bf16.mxu0 0
        %648 = vmatpush1.bf16.msra.mxu0 %v623
        %649 = vmatprep.subr.bf16.mxu0 0
        %650 = vmatpush1.bf16.msra.mxu0 0
        %651 = vmatprep.subr.bf16.mxu0 0
        %652 = vmatpush1.bf16.msra.mxu0 0
        %653 = vmatprep.subr.bf16.mxu0 0
        %654 = vmatpush1.bf16.msra.mxu0 0
        %655 = vmatprep.subr.bf16.mxu0 0
        %656 = vmatpush1.bf16.msra.mxu0 0
        %657 = vmatprep.subr.bf16.mxu0 0
        %658 = vmatpush1.bf16.msra.mxu0 0
        %659 = vmatprep.subr.bf16.mxu0 0
        %660 = vmatpush1.bf16.msra.mxu0 0
        %661 = vmatprep.subr.bf16.mxu0 0
        %662 = vmatpush1.bf16.msra.mxu0 0
        %663 = vmatprep.subr.bf16.mxu0 0
        %664 = vmatpush1.bf16.msra.mxu0 0
        %665 = vmatprep.subr.bf16.mxu0 0
        %666 = vmatpush1.bf16.msra.mxu0 0
        %667 = vmatprep.subr.bf16.mxu0 0
        %668 = vmatpush1.bf16.msra.mxu0 0
        %669 = vmatprep.subr.bf16.mxu0 0
        %670 = vmatpush1.bf16.msra.mxu0 0
        %671 = vmatprep.subr.bf16.mxu0 0
        %672 = vmatpush1.bf16.msra.mxu0 0
        %673 = vmatprep.subr.bf16.mxu0 0
        %674 = vmatpush1.bf16.msra.mxu0 0
        %675 = vmatprep.subr.bf16.mxu0 0
        %676 = vmatpush1.bf16.msra.mxu0 0
        %677 = vmatprep.subr.bf16.mxu0 0
        %678 = vmatpush1.bf16.msra.mxu0 0
        %679 = vmatprep.mubr.bf16.mxu0 0
        %680 = vmatmul.mubr.bf16.gmra.mrb[0].mxu0 %v642
        %v681 = vpop.f32.mrb[0].mxu0
        %v682 = vadd.f32 0.0, %v681
        %v683 = vpop.f32.mrb[0].mxu0
        %v684 = vpop.f32.mrb[0].mxu0
        %v685 = vadd.f32 0.0, %v684
        %v686 = vpop.f32.mrb[0].mxu0
        %687 = vmatprep.mubr.bf16.mxu0 0
        %688 = vmatmul.mubr.bf16.gmra.mrb[0].mxu0 %v645
        %v689 = vpop.f32.mrb[0].mxu0
        %v690 = vadd.f32 0.0, %v689
        %v691 = vpop.f32.mrb[0].mxu0
        %v692 = vpop.f32.mrb[0].mxu0
        %v693 = vadd.f32 0.0, %v692
        %v694 = vpop.f32.mrb[0].mxu0
        %695 = vdwg.mxu0
        %v696 = vld [vmem:[#allocation3] sm:$0xff]
        %v697 = vadd.f32 %v696, %v682
        %vm698 = vcmask 64512
        %699 = vst.msk [vmem:[#allocation3] sm:$0xff] %vm698, %v697
        %v700 = vld [vmem:[#allocation3 + $0x8] sm:$0xff]
        %702 = vrot.lane.b32.xlu0 %v685, 120
        %v703 = vpop.permute.xlu0 %702
        %v705 = vadd.f32 %v700, %v703
        %706 = vst.msk [vmem:[#allocation3 + $0x8] sm:$0xff] %vm698, %v705
        %v707 = vld [vmem:[#allocation3 + $0x10] sm:$0xff]
        %709 = vrot.lane.b32.xlu0 %v690, 112
        %v710 = vpop.permute.xlu0 %709
        %v712 = vadd.f32 %v707, %v710
        %713 = vst.msk [vmem:[#allocation3 + $0x10] sm:$0xff] %vm698, %v712
        %v714 = vld [vmem:[#allocation3 + $0x18] sm:$0xff]
        %716 = vrot.lane.b32.xlu0 %v693, 104
        %v717 = vpop.permute.xlu0 %716
        %v719 = vadd.f32 %v714, %v717
        %720 = vst.msk [vmem:[#allocation3 + $0x18] sm:$0xff] %vm698, %v719
        %p721 = scmp.eq.s32.totalorder %s38, 1
        // Predicated region
        $region69: #{tpu_custom_call.1} parent=47 // pred_check
          %p722 = pneg %p721
        $region70: #{tpu_custom_call.1} parent=47 // pred_check_branch
          %724 = sbr.rel (%p722) target = $region72
        $region71: #{tpu_custom_call.1} parent=47 // pred_region
          %v725 = vld [vmem:[#allocation3] sm:$0xff]
          %v726 = vld [vmem:[#allocation3 + $0x8] sm:$0xff]
          %v727 = vld [vmem:[#allocation3 + $0x10] sm:$0xff]
          %v728 = vld [vmem:[#allocation3 + $0x18] sm:$0xff]
          %v729 = vpack.c.bf16 %v726, %v725
          %v730 = vpack.c.bf16 %v728, %v727
          %v731 = vld [vmem:[%s6] sm:$0xf]
          %v733 = vsel %vm698, %v729, 0
          %vm735 = vcmask 1043456
          %v737 = vsel %vm735, %v731, 0
          %739 = vmatprep.subr.bf16.mxu0 0
          %740 = vmatpush1.bf16.msra.mxu0 %v737
          %741 = vmatprep.subr.bf16.mxu0 0
          %742 = vmatpush1.bf16.msra.mxu0 0
          %743 = vmatprep.subr.bf16.mxu0 0
          %744 = vmatpush1.bf16.msra.mxu0 0
          %745 = vmatprep.subr.bf16.mxu0 0
          %746 = vmatpush1.bf16.msra.mxu0 0
          %747 = vmatprep.subr.bf16.mxu0 0
          %748 = vmatpush1.bf16.msra.mxu0 0
          %749 = vmatprep.subr.bf16.mxu0 0
          %750 = vmatpush1.bf16.msra.mxu0 0
          %751 = vmatprep.subr.bf16.mxu0 0
          %752 = vmatpush1.bf16.msra.mxu0 0
          %753 = vmatprep.subr.bf16.mxu0 0
          %754 = vmatpush1.bf16.msra.mxu0 0
          %755 = vmatprep.subr.bf16.mxu0 0
          %756 = vmatpush1.bf16.msra.mxu0 0
          %757 = vmatprep.subr.bf16.mxu0 0
          %758 = vmatpush1.bf16.msra.mxu0 0
          %759 = vmatprep.subr.bf16.mxu0 0
          %760 = vmatpush1.bf16.msra.mxu0 0
          %761 = vmatprep.subr.bf16.mxu0 0
          %762 = vmatpush1.bf16.msra.mxu0 0
          %763 = vmatprep.subr.bf16.mxu0 0
          %764 = vmatpush1.bf16.msra.mxu0 0
          %765 = vmatprep.subr.bf16.mxu0 0
          %766 = vmatpush1.bf16.msra.mxu0 0
          %767 = vmatprep.subr.bf16.mxu0 0
          %768 = vmatpush1.bf16.msra.mxu0 0
          %769 = vmatprep.subr.bf16.mxu0 0
          %770 = vmatpush1.bf16.msra.mxu0 0
          %771 = vmatprep.mubr.bf16.mxu0 0
          %772 = vmatmul.mubr.bf16.gmra.mrb[0].mxu0 %v733
          %v773 = vpop.f32.mrb[0].mxu0
          %v774 = vadd.f32 0.0, %v773
          %v775 = vpop.f32.mrb[0].mxu0
          %v776 = vpop.f32.mrb[0].mxu0
          %v777 = vpop.f32.mrb[0].mxu0
          %778 = vdwg.mxu0
          %v779 = vpack.c.bf16 %v774, %v774
          %vm780 = vcmask 257024
          %781 = vst.msk [vmem:[%s422] sm:$0xf] %vm780, %v779
          %v782 = vld [vmem:[%s6 + $0x4] sm:$0xf]
          %v784 = vrot.slane %v729, 4
          %v786 = vsel %vm698, %v784, 0
          %v789 = vsel %vm735, %v782, 0
          %791 = vmatprep.subr.bf16.mxu0 0
          %792 = vmatpush1.bf16.msra.mxu0 %v789
          %793 = vmatprep.subr.bf16.mxu0 0
          %794 = vmatpush1.bf16.msra.mxu0 0
          %795 = vmatprep.subr.bf16.mxu0 0
          %796 = vmatpush1.bf16.msra.mxu0 0
          %797 = vmatprep.subr.bf16.mxu0 0
          %798 = vmatpush1.bf16.msra.mxu0 0
          %799 = vmatprep.subr.bf16.mxu0 0
          %800 = vmatpush1.bf16.msra.mxu0 0
          %801 = vmatprep.subr.bf16.mxu0 0
          %802 = vmatpush1.bf16.msra.mxu0 0
          %803 = vmatprep.subr.bf16.mxu0 0
          %804 = vmatpush1.bf16.msra.mxu0 0
          %805 = vmatprep.subr.bf16.mxu0 0
          %806 = vmatpush1.bf16.msra.mxu0 0
          %807 = vmatprep.subr.bf16.mxu0 0
          %808 = vmatpush1.bf16.msra.mxu0 0
          %809 = vmatprep.subr.bf16.mxu0 0
          %810 = vmatpush1.bf16.msra.mxu0 0
          %811 = vmatprep.subr.bf16.mxu0 0
          %812 = vmatpush1.bf16.msra.mxu0 0
          %813 = vmatprep.subr.bf16.mxu0 0
          %814 = vmatpush1.bf16.msra.mxu0 0
          %815 = vmatprep.subr.bf16.mxu0 0
          %816 = vmatpush1.bf16.msra.mxu0 0
          %817 = vmatprep.subr.bf16.mxu0 0
          %818 = vmatpush1.bf16.msra.mxu0 0
          %819 = vmatprep.subr.bf16.mxu0 0
          %820 = vmatpush1.bf16.msra.mxu0 0
          %821 = vmatprep.subr.bf16.mxu0 0
          %822 = vmatpush1.bf16.msra.mxu0 0
          %823 = vmatprep.mubr.bf16.mxu0 0
          %824 = vmatmul.mubr.bf16.gmra.mrb[0].mxu0 %v786
          %v825 = vpop.f32.mrb[0].mxu0
          %v826 = vadd.f32 0.0, %v825
          %v827 = vpop.f32.mrb[0].mxu0
          %v828 = vpop.f32.mrb[0].mxu0
          %v829 = vpop.f32.mrb[0].mxu0
          %830 = vdwg.mxu0
          %v831 = vpack.c.bf16 %v826, %v826
          %832 = vst.msk [vmem:[%s422 + $0x4] sm:$0xf] %vm780, %v831
          %v833 = vld [vmem:[%s6 + $0x8] sm:$0xf]
          %v835 = vsel %vm698, %v730, 0
          %v838 = vsel %vm735, %v833, 0
          %840 = vmatprep.subr.bf16.mxu0 0
          %841 = vmatpush1.bf16.msra.mxu0 %v838
          %842 = vmatprep.subr.bf16.mxu0 0
          %843 = vmatpush1.bf16.msra.mxu0 0
          %844 = vmatprep.subr.bf16.mxu0 0
          %845 = vmatpush1.bf16.msra.mxu0 0
          %846 = vmatprep.subr.bf16.mxu0 0
          %847 = vmatpush1.bf16.msra.mxu0 0
          %848 = vmatprep.subr.bf16.mxu0 0
          %849 = vmatpush1.bf16.msra.mxu0 0
          %850 = vmatprep.subr.bf16.mxu0 0
          %851 = vmatpush1.bf16.msra.mxu0 0
          %852 = vmatprep.subr.bf16.mxu0 0
          %853 = vmatpush1.bf16.msra.mxu0 0
          %854 = vmatprep.subr.bf16.mxu0 0
          %855 = vmatpush1.bf16.msra.mxu0 0
          %856 = vmatprep.subr.bf16.mxu0 0
          %857 = vmatpush1.bf16.msra.mxu0 0
          %858 = vmatprep.subr.bf16.mxu0 0
          %859 = vmatpush1.bf16.msra.mxu0 0
          %860 = vmatprep.subr.bf16.mxu0 0
          %861 = vmatpush1.bf16.msra.mxu0 0
          %862 = vmatprep.subr.bf16.mxu0 0
          %863 = vmatpush1.bf16.msra.mxu0 0
          %864 = vmatprep.subr.bf16.mxu0 0
          %865 = vmatpush1.bf16.msra.mxu0 0
          %866 = vmatprep.subr.bf16.mxu0 0
          %867 = vmatpush1.bf16.msra.mxu0 0
          %868 = vmatprep.subr.bf16.mxu0 0
          %869 = vmatpush1.bf16.msra.mxu0 0
          %870 = vmatprep.subr.bf16.mxu0 0
          %871 = vmatpush1.bf16.msra.mxu0 0
          %872 = vmatprep.mubr.bf16.mxu0 0
          %873 = vmatmul.mubr.bf16.gmra.mrb[0].mxu0 %v835
          %v874 = vpop.f32.mrb[0].mxu0
          %v875 = vadd.f32 0.0, %v874
          %v876 = vpop.f32.mrb[0].mxu0
          %v877 = vpop.f32.mrb[0].mxu0
          %v878 = vpop.f32.mrb[0].mxu0
          %879 = vdwg.mxu0
          %v880 = vpack.c.bf16 %v875, %v875
          %881 = vst.msk [vmem:[%s422 + $0x8] sm:$0xf] %vm780, %v880
          %v882 = vld [vmem:[%s6 + $0xc] sm:$0xf]
          %v884 = vrot.slane %v730, 4
          %v886 = vsel %vm698, %v884, 0
          %v889 = vsel %vm735, %v882, 0
          %891 = vmatprep.subr.bf16.mxu0 0
          %892 = vmatpush1.bf16.msra.mxu0 %v889
          %893 = vmatprep.subr.bf16.mxu0 0
          %894 = vmatpush1.bf16.msra.mxu0 0
          %895 = vmatprep.subr.bf16.mxu0 0
          %896 = vmatpush1.bf16.msra.mxu0 0
          %897 = vmatprep.subr.bf16.mxu0 0
          %898 = vmatpush1.bf16.msra.mxu0 0
          %899 = vmatprep.subr.bf16.mxu0 0
          %900 = vmatpush1.bf16.msra.mxu0 0
          %901 = vmatprep.subr.bf16.mxu0 0
          %902 = vmatpush1.bf16.msra.mxu0 0
          %903 = vmatprep.subr.bf16.mxu0 0
          %904 = vmatpush1.bf16.msra.mxu0 0
          %905 = vmatprep.subr.bf16.mxu0 0
          %906 = vmatpush1.bf16.msra.mxu0 0
          %907 = vmatprep.subr.bf16.mxu0 0
          %908 = vmatpush1.bf16.msra.mxu0 0
          %909 = vmatprep.subr.bf16.mxu0 0
          %910 = vmatpush1.bf16.msra.mxu0 0
          %911 = vmatprep.subr.bf16.mxu0 0
          %912 = vmatpush1.bf16.msra.mxu0 0
          %913 = vmatprep.subr.bf16.mxu0 0
          %914 = vmatpush1.bf16.msra.mxu0 0
          %915 = vmatprep.subr.bf16.mxu0 0
          %916 = vmatpush1.bf16.msra.mxu0 0
          %917 = vmatprep.subr.bf16.mxu0 0
          %918 = vmatpush1.bf16.msra.mxu0 0
          %919 = vmatprep.subr.bf16.mxu0 0
          %920 = vmatpush1.bf16.msra.mxu0 0
          %921 = vmatprep.subr.bf16.mxu0 0
          %922 = vmatpush1.bf16.msra.mxu0 0
          %923 = vmatprep.mubr.bf16.mxu0 0
          %924 = vmatmul.mubr.bf16.gmra.mrb[0].mxu0 %v886
          %v925 = vpop.f32.mrb[0].mxu0
          %v926 = vadd.f32 0.0, %v925
          %v927 = vpop.f32.mrb[0].mxu0
          %v928 = vpop.f32.mrb[0].mxu0
          %v929 = vpop.f32.mrb[0].mxu0
          %930 = vdwg.mxu0
          %v931 = vpack.c.bf16 %v926, %v926
          %932 = vst.msk [vmem:[%s422 + $0xc] sm:$0xf] %vm780, %v931
          %v933 = vld [vmem:[#allocation2] sm:$0x1]
          %934 = vst.msk [vmem:[%s415] sm:$0x1] %vm620, %v933
        $region72: #{tpu_custom_call.1} parent=47 // pred_fallthru
          _
        %s935 = sand.u32 %s214, 1
        %s936 = scalar_lea.sflag [#allocation6], %s935
        %s937 = sand.u32 %s214, 1
        %s938 = scalar_lea.vmem [#allocation12], %s937
        %s939 = sand.u32 %s240, 1
        %s940 = scalar_lea.sflag [#allocation14], %s939
        %s941 = sand.u32 %s240, 1
        %s942 = smul.addr %s941, 16
        %s943 = scalar_lea.vmem [#allocation13], %s942
        // Predicated region
        $region73: #{tpu_custom_call.1} parent=47 // pred_check
          %p944 = pneg %p224
        $region74: #{tpu_custom_call.1} parent=47 // pred_check_branch
          %946 = sbr.rel (%p944) target = $region76
        $region75: #{tpu_custom_call.1} parent=47 // pred_region
          %s948 = ssub.s32 16, 16
          %949 = vsyncadd %s936, %s948
          %s950 = smul.addr %s37, 16
          %s951 = scalar_lea.hbm %s7, %s950
          %s953 = sshll.u32 %s938, 4
          %s954 = int_to_ptr.vmem [resolvable:$true] %s953
          %956 = dma.vmem_to_hbm [thread:$0]  %s954, 16, %s951, %s936
        $region76: #{tpu_custom_call.1} parent=47 // pred_fallthru
          _
        // Predicated region
        $region77: #{tpu_custom_call.1} parent=47 // pred_check
          %p957 = pneg %p250
        $region78: #{tpu_custom_call.1} parent=47 // pred_check_branch
          %959 = sbr.rel (%p957) target = $region80
        $region79: #{tpu_custom_call.1} parent=47 // pred_region
          %s961 = ssub.s32 256, 256
          %962 = vsyncadd %s940, %s961
          %s963 = smul.addr %s37, 4
          %s964 = smul.addr %s963, 64
          %s965 = scalar_lea.hbm %s8, %s964
          %s966 = sshll.u32 %s943, 4
          %s967 = int_to_ptr.vmem [resolvable:$true] %s966
          %972 = dma.vmem_to_hbm [thread:$0]  %s967, 256, %s965, %s940, 64, 64, 4
        $region80: #{tpu_custom_call.1} parent=47 // pred_fallthru
          _
      $region48: #{tpu_custom_call.1} parent=5 // pred_fallthru
        _
      %p973 = scmp.le.s32.totalorder 2, %s28
      // Predicated region
      $region81: #{tpu_custom_call.1} parent=5 // pred_check
        %p974 = pneg %p973
      $region82: #{tpu_custom_call.1} parent=5 // pred_check_branch
        %976 = sbr.rel (%p974) target = $region84
      $region83: #{tpu_custom_call.1} parent=5 // pred_region
        %s977 = ssub.s32 %s28, 2
        // Predicated region
        $region85: #{tpu_custom_call.1} parent=83 // pred_check
          %p978 = pneg %p230
        $region86: #{tpu_custom_call.1} parent=83 // pred_check_branch
          %980 = sbr.rel (%p978) target = $region88
        $region87: #{tpu_custom_call.1} parent=83 // pred_region
          %s981 = sand.u32 %s215, 1
          %s982 = scalar_lea.sflag [#allocation6], %s981
          %s983 = sand.u32 %s215, 1
          %s984 = scalar_lea.vmem [#allocation12], %s983
          %985 = dma.done %s982, 16
        $region88: #{tpu_custom_call.1} parent=83 // pred_fallthru
          _
        // Predicated region
        $region89: #{tpu_custom_call.1} parent=83 // pred_check
          %p986 = pneg %p256
        $region90: #{tpu_custom_call.1} parent=83 // pred_check_branch
          %988 = sbr.rel (%p986) target = $region92
        $region91: #{tpu_custom_call.1} parent=83 // pred_region
          %s989 = sand.u32 %s241, 1
          %s990 = scalar_lea.sflag [#allocation14], %s989
          %s991 = sand.u32 %s241, 1
          %s992 = smul.addr %s991, 16
          %s993 = scalar_lea.vmem [#allocation13], %s992
          %994 = dma.done %s990, 256
        $region92: #{tpu_custom_call.1} parent=83 // pred_fallthru
          _
      $region84: #{tpu_custom_call.1} parent=5 // pred_fallthru
        _
    $region6: #{tpu_custom_call.1} parent=1 // loop_footer
      %s32 = sadd.s32 1, %s28
    $region7: #{tpu_custom_call.1} parent=1 // loop_footer_branch
      %27 = sbr.rel target = $region3
    $region8: #{tpu_custom_call.1} parent=1 // loop_exit
      _
    %995 = vsyncpa [#allocation5], 1
    %s996 = scalar_lea.sflag [#allocation5], 1
    %997 = vsyncpa %s996, 1
    %998 = vsyncpa [#allocation8], 1
    %s999 = scalar_lea.sflag [#allocation8], 1
    %1000 = vsyncpa %s999, 1
    %1001 = vsyncpa [#allocation11], 1
    %1002 = vsyncpa [#allocation6], 1
    %s1003 = scalar_lea.sflag [#allocation6], 1
    %1004 = vsyncpa %s1003, 1
    %1005 = vsyncpa [#allocation14], 1
    %s1006 = scalar_lea.sflag [#allocation14], 1
    %1007 = vsyncpa %s1006, 1

// kernel: tpu_custom_call.1
$region0: #{tpu_custom_call.1}
  #allocation0 [shape = 'u32[]', space=smem, size = 0x4, offset = 0x4, fixed_abs, tag = 'smem constant byte address 0x4 - core index']
  #allocation1 [shape = 'u32[144,128]{1,0:T(1,128)}', space=vmem, size = 0x12000, scoped, tag = 'internal scratch']
  #allocation2 [shape = 'f32[1,32]{1,0:T(1,128)}', space=vmem, size = 0x200, scoped, tag = 'scratch operand']
  #allocation3 [shape = 'f32[32,8]{1,0:T(8,128)}', space=vmem, size = 0x4000, scoped, tag = 'scratch operand']
  %s0 = inlined_call_operand.hbm [shape: bf16[2,32,32], index: 0, kind: input, shape index: {}]
  %s1 = inlined_call_operand.hbm [shape: bf16[2,32,32], index: 1, kind: input, shape index: {}]
  %s2 = inlined_call_operand.hbm [shape: bf16[32,32], index: 2, kind: input, shape index: {}]
  %s3 = inlined_call_operand.vmem [shape: f32[1,32], index: 3, kind: input, shape index: {}]
  %s4 = inlined_call_operand.hbm [shape: bf16[32,32], index: 4, kind: input, shape index: {}]
  %s5 = inlined_call_operand.vmem [shape: f32[1,32], index: 5, kind: input, shape index: {}]
  %s6 = inlined_call_operand.vmem [shape: bf16[32,32], index: 6, kind: input, shape index: {}]
  %s7 = inlined_call_operand.hbm [shape: f32[2,1,32], index: 7, kind: output, shape index: {0}]
  %s8 = inlined_call_operand.hbm [shape: bf16[2,32,32], index: 8, kind: output, shape index: {1}]
  %9 = xla_tuple %s7, %s8
  %s10 = sld [smem:[#allocation0]]
  $region93: #{tpu_custom_call.1} parent=0
    _
  %s12 = ssub.s32 1, %s10
  %s13 = scalar_select 0, %s12, %s10
  $region1: #{tpu_custom_call.1} parent=0
    #allocation4 [shape = 'u8[8192]{0}', space=vmem, size = 0x2000, scoped, tag = 'input window, operand 0']
    #allocation5 [shape = 's32[2]{0}', space=sflag, size = 0x8, scoped, tag = 'scoped memory for tpu_custom_call.1']
    #allocation6 [shape = 's32[2]{0}', space=sflag, size = 0x8, scoped, tag = 'scoped memory for tpu_custom_call.1']
    #allocation7 [shape = 'u8[8192]{0}', space=vmem, size = 0x2000, scoped, tag = 'input window, operand 1']
    #allocation8 [shape = 's32[2]{0}', space=sflag, size = 0x8, scoped, tag = 'scoped memory for tpu_custom_call.1']
    #allocation9 [shape = 'u8[8192]{0}', space=vmem, size = 0x2000, scoped, tag = 'input window, operand 2, single buffered']
    #allocation10 [shape = 'u8[8192]{0}', space=vmem, size = 0x2000, scoped, tag = 'input window, operand 4, single buffered']
    #allocation11 [shape = 's32[1]{0}', space=sflag, size = 0x4, scoped, tag = 'scoped memory for tpu_custom_call.1']
    #allocation12 [shape = 'u8[1024]{0}', space=vmem, size = 0x400, scoped, tag = 'output window, operand 0']
    #allocation13 [shape = 'u8[16384]{0}', space=vmem, size = 0x4000, scoped, tag = 'output window, operand 1']
    #allocation14 [shape = 's32[2]{0}', space=sflag, size = 0x8, scoped, tag = 'scoped memory for tpu_custom_call.1']
    %14 = vsyncpa [#allocation5], 0
    %s15 = scalar_lea.sflag [#allocation5], 1
    %16 = vsyncpa %s15, 0
    %17 = vsyncpa [#allocation8], 0
    %s18 = scalar_lea.sflag [#allocation8], 1
    %19 = vsyncpa %s18, 0
    %20 = vsyncpa [#allocation11], 0
    %21 = vsyncpa [#allocation6], 0
    %s22 = scalar_lea.sflag [#allocation6], 1
    %23 = vsyncpa %s22, 0
    %24 = vsyncpa [#allocation14], 0
    %s25 = scalar_lea.sflag [#allocation14], 1
    %26 = vsyncpa %s25, 0
    loop: start=0, step=1, limit=6
    $region2: #{tpu_custom_call.1} parent=1 // loop_pre_header
      _
    $region3: #{tpu_custom_call.1} parent=1 // loop_header
      %s28 = sphi 0, %s32
      %p29 = scmp.ge.s32.totalorder %s28, 6
      %s35 = sphi 0, %s47
      %s36 = sphi 0, %s43
      %s37 = sphi 0, %s35
      %s38 = sphi 0, %s36
      %s39 = sphi 0, %s37
      %s40 = sphi 0, %s38
      %s52 = sphi 0, %s54
      %s55 = sphi 0, %s52
      %s56 = sphi 0, %s55
      %s72 = sphi 0, %s56
      %s80 = sphi 0, %s82
      %s83 = sphi 0, %s80
      %s84 = sphi 0, %s83
      %s100 = sphi 0, %s84
      %s104 = sphi 0, %s104
      %s106 = sphi 0, %s104
      %s107 = sphi 0, %s106
      %s121 = sphi 0, %s107
      %s125 = sphi 0, %s125
      %s127 = sphi 0, %s125
      %s128 = sphi 0, %s127
      %s142 = sphi 0, %s128
      %s146 = sphi 0, %s146
      %s148 = sphi 0, %s146
      %s149 = sphi 0, %s148
      %s163 = sphi 0, %s149
      %s167 = sphi 0, %s167
      %s169 = sphi 0, %s167
      %s170 = sphi 0, %s169
      %s184 = sphi 0, %s170
      %s188 = sphi 0, %s188
      %s190 = sphi 0, %s188
      %s191 = sphi 0, %s190
      %s205 = sphi 0, %s191
      %s211 = sphi 0, %s213
      %s214 = sphi 0, %s211
      %s215 = sphi 0, %s214
      %s231 = sphi 0, %s215
      %s237 = sphi 0, %s239
      %s240 = sphi 0, %s237
      %s241 = sphi 0, %s240
      %s257 = sphi 0, %s241
    $region4: #{tpu_custom_call.1} parent=1 // loop_header_branch
      %31 = sbr.rel (%p29) target = $region8
    $region5: #{tpu_custom_call.1} parent=1 // loop_body
      %s33 = ssub.s32 %s28, 1
      %s34 = ssub.s32 %s28, 2
      %s41 = sadd.s32 1, %s36
      %p42 = scmp.ge.s32.totalorder %s41, 2
      %s43 = scalar_select %p42, 0, %s41
      %s44 = sadd.s32 1, %s35
      %s45 = scalar_select %p42, %s44, %s35
      %p46 = scmp.ge.s32.totalorder %s45, 2
      %s47 = scalar_select %p46, 0, %s45
      %s48 = ssub.s32 %s35, %s47
      %s49 = ssub.s32 %s36, %s43
      %s50 = sor.u32 %s48, %s49
      %p51 = scmp.eq.s32.totalorder %s50, 0
      %s53 = sadd.s32 %s52, 1
      %s54 = scalar_select %p51, %s52, %s53
      %p57 = pneg %p51
      %p58 = scmp.eq.s32.totalorder %s28, 3
      %p59 = por %p57, %p58
      %p60 = scmp.ne.s32.totalorder %s52, %s55
      %p61 = scmp.eq.s32.totalorder %s28, 0
      %p62 = por %p60, %p61
      %p63 = scmp.ne.s32.totalorder %s52, %s55
      %p64 = scmp.eq.s32.totalorder %s33, 3
      %p65 = por %p63, %p64
      %p66 = scmp.ne.s32.totalorder %s55, %s56
      %p67 = scmp.eq.s32.totalorder %s33, 0
      %p68 = por %p66, %p67
      %p69 = scmp.ne.s32.totalorder %s55, %s56
      %p70 = scmp.eq.s32.totalorder %s34, 3
      %p71 = por %p69, %p70
      %p73 = scmp.ne.s32.totalorder %s56, %s72
      %p74 = scmp.eq.s32.totalorder %s34, 0
      %p75 = por %p73, %p74
      %s76 = ssub.s32 %s35, %s47
      %s77 = ssub.s32 %s36, %s43
      %s78 = sor.u32 %s76, %s77
      %p79 = scmp.eq.s32.totalorder %s78, 0
      %s81 = sadd.s32 %s80, 1
      %s82 = scalar_select %p79, %s80, %s81
      %p85 = pneg %p79
      %p86 = scmp.eq.s32.totalorder %s28, 3
      %p87 = por %p85, %p86
      %p88 = scmp.ne.s32.totalorder %s80, %s83
      %p89 = scmp.eq.s32.totalorder %s28, 0
      %p90 = por %p88, %p89
      %p91 = scmp.ne.s32.totalorder %s80, %s83
      %p92 = scmp.eq.s32.totalorder %s33, 3
      %p93 = por %p91, %p92
      %p94 = scmp.ne.s32.totalorder %s83, %s84
      %p95 = scmp.eq.s32.totalorder %s33, 0
      %p96 = por %p94, %p95
      %p97 = scmp.ne.s32.totalorder %s83, %s84
      %p98 = scmp.eq.s32.totalorder %s34, 3
      %p99 = por %p97, %p98
      %p101 = scmp.ne.s32.totalorder %s84, %s100
      %p102 = scmp.eq.s32.totalorder %s34, 0
      %p103 = por %p101, %p102
      %s105 = sadd.s32 %s104, 1
      %p108 = scmp.eq.s32.totalorder %s28, 3
      %p109 = scmp.ne.s32.totalorder %s104, %s106
      %p110 = scmp.eq.s32.totalorder %s28, 0
      %p111 = por %p109, %p110
      %p112 = scmp.ne.s32.totalorder %s104, %s106
      %p113 = scmp.eq.s32.totalorder %s33, 3
      %p114 = por %p112, %p113
      %p115 = scmp.ne.s32.totalorder %s106, %s107
      %p116 = scmp.eq.s32.totalorder %s33, 0
      %p117 = por %p115, %p116
      %p118 = scmp.ne.s32.totalorder %s106, %s107
      %p119 = scmp.eq.s32.totalorder %s34, 3
      %p120 = por %p118, %p119
      %p122 = scmp.ne.s32.totalorder %s107, %s121
      %p123 = scmp.eq.s32.totalorder %s34, 0
      %p124 = por %p122, %p123
      %s126 = sadd.s32 %s125, 1
      %p129 = scmp.eq.s32.totalorder %s28, 3
      %p130 = scmp.ne.s32.totalorder %s125, %s127
      %p131 = scmp.eq.s32.totalorder %s28, 0
      %p132 = por %p130, %p131
      %p133 = scmp.ne.s32.totalorder %s125, %s127
      %p134 = scmp.eq.s32.totalorder %s33, 3
      %p135 = por %p133, %p134
      %p136 = scmp.ne.s32.totalorder %s127, %s128
      %p137 = scmp.eq.s32.totalorder %s33, 0
      %p138 = por %p136, %p137
      %p139 = scmp.ne.s32.totalorder %s127, %s128
      %p140 = scmp.eq.s32.totalorder %s34, 3
      %p141 = por %p139, %p140
      %p143 = scmp.ne.s32.totalorder %s128, %s142
      %p144 = scmp.eq.s32.totalorder %s34, 0
      %p145 = por %p143, %p144
      %s147 = sadd.s32 %s146, 1
      %p150 = scmp.eq.s32.totalorder %s28, 3
      %p151 = scmp.ne.s32.totalorder %s146, %s148
      %p152 = scmp.eq.s32.totalorder %s28, 0
      %p153 = por %p151, %p152
      %p154 = scmp.ne.s32.totalorder %s146, %s148
      %p155 = scmp.eq.s32.totalorder %s33, 3
      %p156 = por %p154, %p155
      %p157 = scmp.ne.s32.totalorder %s148, %s149
      %p158 = scmp.eq.s32.totalorder %s33, 0
      %p159 = por %p157, %p158
      %p160 = scmp.ne.s32.totalorder %s148, %s149
      %p161 = scmp.eq.s32.totalorder %s34, 3
      %p162 = por %p160, %p161
      %p164 = scmp.ne.s32.totalorder %s149, %s163
      %p165 = scmp.eq.s32.totalorder %s34, 0
      %p166 = por %p164, %p165
      %s168 = sadd.s32 %s167, 1
      %p171 = scmp.eq.s32.totalorder %s28, 3
      %p172 = scmp.ne.s32.totalorder %s167, %s169
      %p173 = scmp.eq.s32.totalorder %s28, 0
      %p174 = por %p172, %p173
      %p175 = scmp.ne.s32.totalorder %s167, %s169
      %p176 = scmp.eq.s32.totalorder %s33, 3
      %p177 = por %p175, %p176
      %p178 = scmp.ne.s32.totalorder %s169, %s170
      %p179 = scmp.eq.s32.totalorder %s33, 0
      %p180 = por %p178, %p179
      %p181 = scmp.ne.s32.totalorder %s169, %s170
      %p182 = scmp.eq.s32.totalorder %s34, 3
      %p183 = por %p181, %p182
      %p185 = scmp.ne.s32.totalorder %s170, %s184
      %p186 = scmp.eq.s32.totalorder %s34, 0
      %p187 = por %p185, %p186
      %s189 = sadd.s32 %s188, 1
      %p192 = scmp.eq.s32.totalorder %s28, 3
      %p193 = scmp.ne.s32.totalorder %s188, %s190
      %p194 = scmp.eq.s32.totalorder %s28, 0
      %p195 = por %p193, %p194
      %p196 = scmp.ne.s32.totalorder %s188, %s190
      %p197 = scmp.eq.s32.totalorder %s33, 3
      %p198 = por %p196, %p197
      %p199 = scmp.ne.s32.totalorder %s190, %s191
      %p200 = scmp.eq.s32.totalorder %s33, 0
      %p201 = por %p199, %p200
      %p202 = scmp.ne.s32.totalorder %s190, %s191
      %p203 = scmp.eq.s32.totalorder %s34, 3
      %p204 = por %p202, %p203
      %p206 = scmp.ne.s32.totalorder %s191, %s205
      %p207 = scmp.eq.s32.totalorder %s34, 0
      %p208 = por %p206, %p207
      %s209 = ssub.s32 %s35, %s47
      %p210 = scmp.eq.s32.totalorder %s209, 0
      %s212 = sadd.s32 %s211, 1
      %s213 = scalar_select %p210, %s211, %s212
      %p216 = pneg %p210
      %p217 = scmp.eq.s32.totalorder %s28, 3
      %p218 = por %p216, %p217
      %p219 = scmp.ne.s32.totalorder %s211, %s214
      %p220 = scmp.eq.s32.totalorder %s28, 0
      %p221 = por %p219, %p220
      %p222 = scmp.ne.s32.totalorder %s211, %s214
      %p223 = scmp.eq.s32.totalorder %s33, 3
      %p224 = por %p222, %p223
      %p225 = scmp.ne.s32.totalorder %s214, %s215
      %p226 = scmp.eq.s32.totalorder %s33, 0
      %p227 = por %p225, %p226
      %p228 = scmp.ne.s32.totalorder %s214, %s215
      %p229 = scmp.eq.s32.totalorder %s34, 3
      %p230 = por %p228, %p229
      %p232 = scmp.ne.s32.totalorder %s215, %s231
      %p233 = scmp.eq.s32.totalorder %s34, 0
      %p234 = por %p232, %p233
      %s235 = ssub.s32 %s35, %s47
      %p236 = scmp.eq.s32.totalorder %s235, 0
      %s238 = sadd.s32 %s237, 1
      %s239 = scalar_select %p236, %s237, %s238
      %p242 = pneg %p236
      %p243 = scmp.eq.s32.totalorder %s28, 3
      %p244 = por %p242, %p243
      %p245 = scmp.ne.s32.totalorder %s237, %s240
      %p246 = scmp.eq.s32.totalorder %s28, 0
      %p247 = por %p245, %p246
      %p248 = scmp.ne.s32.totalorder %s237, %s240
      %p249 = scmp.eq.s32.totalorder %s33, 3
      %p250 = por %p248, %p249
      %p251 = scmp.ne.s32.totalorder %s240, %s241
      %p252 = scmp.eq.s32.totalorder %s33, 0
      %p253 = por %p251, %p252
      %p254 = scmp.ne.s32.totalorder %s240, %s241
      %p255 = scmp.eq.s32.totalorder %s34, 3
      %p256 = por %p254, %p255
      %p258 = scmp.ne.s32.totalorder %s241, %s257
      %p259 = scmp.eq.s32.totalorder %s34, 0
      %p260 = por %p258, %p259
      %p261 = scmp.le.s32.totalorder 1, %s28
      %p262 = scmp.lt.s32.totalorder %s28, 5
      %p263 = pnand %p261, %p262
      %p264 = pneg %p263
      // Predicated region
      $region9: #{tpu_custom_call.1} parent=5 // pred_check
        _
      $region10: #{tpu_custom_call.1} parent=5 // pred_check_branch
        %266 = sbr.rel (%p263) target = $region12
      $region11: #{tpu_custom_call.1} parent=5 // pred_region
        %s267 = ssub.s32 %s28, 1
        // Predicated region
        $region13: #{tpu_custom_call.1} parent=11 // pred_check
          %p268 = pneg %p117
        $region14: #{tpu_custom_call.1} parent=11 // pred_check_branch
          %270 = sbr.rel (%p268) target = $region16
        $region15: #{tpu_custom_call.1} parent=11 // pred_region
          %s272 = ssub.s32 256, 256
          %273 = vsyncadd [#allocation8], %s272
          %s274 = sshll.u32 [#allocation9], 4
          %s275 = int_to_ptr.vmem [resolvable:$true] %s274
          %280 = dma.hbm_to_vmem [thread:$0]  %s2, 256, %s275, [#allocation8], 64, 64, 4
        $region16: #{tpu_custom_call.1} parent=11 // pred_fallthru
          _
        // Predicated region
        $region17: #{tpu_custom_call.1} parent=11 // pred_check
          %p281 = pneg %p138
        $region18: #{tpu_custom_call.1} parent=11 // pred_check_branch
          %283 = sbr.rel (%p281) target = $region20
        $region19: #{tpu_custom_call.1} parent=11 // pred_region
          _
        $region20: #{tpu_custom_call.1} parent=11 // pred_fallthru
          _
        // Predicated region
        $region21: #{tpu_custom_call.1} parent=11 // pred_check
          %p284 = pneg %p159
        $region22: #{tpu_custom_call.1} parent=11 // pred_check_branch
          %286 = sbr.rel (%p284) target = $region24
        $region23: #{tpu_custom_call.1} parent=11 // pred_region
          %s288 = ssub.s32 256, 256
          %289 = vsyncadd [#allocation11], %s288
          %s290 = sshll.u32 [#allocation10], 4
          %s291 = int_to_ptr.vmem [resolvable:$true] %s290
          %296 = dma.hbm_to_vmem [thread:$0]  %s4, 256, %s291, [#allocation11], 64, 64, 4
        $region24: #{tpu_custom_call.1} parent=11 // pred_fallthru
          _
        // Predicated region
        $region25: #{tpu_custom_call.1} parent=11 // pred_check
          %p297 = pneg %p180
        $region26: #{tpu_custom_call.1} parent=11 // pred_check_branch
          %299 = sbr.rel (%p297) target = $region28
        $region27: #{tpu_custom_call.1} parent=11 // pred_region
          _
        $region28: #{tpu_custom_call.1} parent=11 // pred_fallthru
          _
        // Predicated region
        $region29: #{tpu_custom_call.1} parent=11 // pred_check
          %p300 = pneg %p201
        $region30: #{tpu_custom_call.1} parent=11 // pred_check_branch
          %302 = sbr.rel (%p300) target = $region32
        $region31: #{tpu_custom_call.1} parent=11 // pred_region
          _
        $region32: #{tpu_custom_call.1} parent=11 // pred_fallthru
          _
      $region12: #{tpu_custom_call.1} parent=5 // pred_fallthru
        _
      %p303 = scmp.lt.s32.totalorder %s28, 4
      // Predicated region
      $region33: #{tpu_custom_call.1} parent=5 // pred_check
        %p304 = pneg %p303
      $region34: #{tpu_custom_call.1} parent=5 // pred_check_branch
        %306 = sbr.rel (%p304) target = $region36
      $region35: #{tpu_custom_call.1} parent=5 // pred_region
        // Predicated region
        $region37: #{tpu_custom_call.1} parent=35 // pred_check
          %p307 = pneg %p62
        $region38: #{tpu_custom_call.1} parent=35 // pred_check_branch
          %309 = sbr.rel (%p307) target = $region40
        $region39: #{tpu_custom_call.1} parent=35 // pred_region
          %s310 = sand.u32 %s52, 1
          %s311 = scalar_lea.sflag [#allocation5], %s310
          %s312 = sand.u32 %s52, 1
          %s313 = smul.addr %s312, 8
          %s314 = scalar_lea.vmem [#allocation4], %s313
          %s315 = smul.u32 2, %s36
          %s317 = ssub.s32 128, 128
          %318 = vsyncadd %s311, %s317
          %s319 = smul.addr %s35, 4
          %s320 = sadd.s32 %s315, %s319
          %s321 = smul.addr %s320, 64
          %s322 = scalar_lea.hbm %s0, %s321
          %s323 = sshll.u32 %s314, 4
          %s324 = int_to_ptr.vmem [resolvable:$true] %s323
          %329 = dma.hbm_to_vmem [thread:$0]  %s322, 128, %s324, %s311, 64, 64, 4
        $region40: #{tpu_custom_call.1} parent=35 // pred_fallthru
          _
        // Predicated region
        $region41: #{tpu_custom_call.1} parent=35 // pred_check
          %p330 = pneg %p90
        $region42: #{tpu_custom_call.1} parent=35 // pred_check_branch
          %332 = sbr.rel (%p330) target = $region44
        $region43: #{tpu_custom_call.1} parent=35 // pred_region
          %s333 = sand.u32 %s28, 1
          %s334 = scalar_lea.sflag [#allocation8], %s333
          %s335 = sand.u32 %s80, 1
          %s336 = smul.addr %s335, 8
          %s337 = scalar_lea.vmem [#allocation7], %s336
          %s338 = smul.u32 2, %s36
          %s340 = ssub.s32 128, 128
          %341 = vsyncadd %s334, %s340
          %s342 = smul.addr %s35, 4
          %s343 = sadd.s32 %s338, %s342
          %s344 = smul.addr %s343, 64
          %s345 = scalar_lea.hbm %s1, %s344
          %s346 = sshll.u32 %s337, 4
          %s347 = int_to_ptr.vmem [resolvable:$true] %s346
          %352 = dma.hbm_to_vmem [thread:$0]  %s345, 128, %s347, %s334, 64, 64, 4
        $region44: #{tpu_custom_call.1} parent=35 // pred_fallthru
          _
      $region36: #{tpu_custom_call.1} parent=5 // pred_fallthru
        _
      %p353 = scmp.le.s32.totalorder 1, %s28
      %p354 = scmp.lt.s32.totalorder %s28, 5
      %p355 = pnand %p353, %p354
      %p356 = pneg %p355
      // Predicated region
      $region45: #{tpu_custom_call.1} parent=5 // pred_check
        _
      $region46: #{tpu_custom_call.1} parent=5 // pred_check_branch
        %358 = sbr.rel (%p355) target = $region48
      $region47: #{tpu_custom_call.1} parent=5 // pred_region
        %s359 = ssub.s32 %s28, 1
        %s360 = sand.u32 %s55, 1
        %s361 = scalar_lea.sflag [#allocation5], %s360
        %s362 = sand.u32 %s55, 1
        %s363 = smul.addr %s362, 8
        %s364 = scalar_lea.vmem [#allocation4], %s363
        // Predicated region
        $region49: #{tpu_custom_call.1} parent=47 // pred_check
          %p365 = pneg %p68
        $region50: #{tpu_custom_call.1} parent=47 // pred_check_branch
          %367 = sbr.rel (%p365) target = $region52
        $region51: #{tpu_custom_call.1} parent=47 // pred_region
          %368 = dma.done %s361, 128
        $region52: #{tpu_custom_call.1} parent=47 // pred_fallthru
          _
        %s369 = sand.u32 %s33, 1
        %s370 = scalar_lea.sflag [#allocation8], %s369
        %s371 = sand.u32 %s83, 1
        %s372 = smul.addr %s371, 8
        %s373 = scalar_lea.vmem [#allocation7], %s372
        // Predicated region
        $region53: #{tpu_custom_call.1} parent=47 // pred_check
          %p374 = pneg %p96
        $region54: #{tpu_custom_call.1} parent=47 // pred_check_branch
          %376 = sbr.rel (%p374) target = $region56
        $region55: #{tpu_custom_call.1} parent=47 // pred_region
          %377 = dma.done %s370, 128
        $region56: #{tpu_custom_call.1} parent=47 // pred_fallthru
          _
        // Predicated region
        $region57: #{tpu_custom_call.1} parent=47 // pred_check
          %p378 = pneg %p117
        $region58: #{tpu_custom_call.1} parent=47 // pred_check_branch
          %380 = sbr.rel (%p378) target = $region60
        $region59: #{tpu_custom_call.1} parent=47 // pred_region
          %381 = dma.done [#allocation8], 256
        $region60: #{tpu_custom_call.1} parent=47 // pred_fallthru
          _
        // Predicated region
        $region61: #{tpu_custom_call.1} parent=47 // pred_check
          %p382 = pneg %p159
        $region62: #{tpu_custom_call.1} parent=47 // pred_check_branch
          %384 = sbr.rel (%p382) target = $region64
        $region63: #{tpu_custom_call.1} parent=47 // pred_region
          %385 = dma.done [#allocation11], 256
        $region64: #{tpu_custom_call.1} parent=47 // pred_fallthru
          _
        %s386 = sand.u32 %s55, 1
        %s387 = scalar_lea.sflag [#allocation5], %s386
        %s388 = sand.u32 %s55, 1
        %s389 = smul.addr %s388, 8
        %s390 = scalar_lea.vmem [#allocation4], %s389
        %p391 = pneg %p68
        %p392 = pneg %p65
        %s393 = sand.u32 %s33, 1
        %s394 = scalar_lea.sflag [#allocation8], %s393
        %s395 = sand.u32 %s83, 1
        %s396 = smul.addr %s395, 8
        %s397 = scalar_lea.vmem [#allocation7], %s396
        %p398 = pneg %p96
        %p399 = pneg %p93
        %p400 = pneg %p117
        %p401 = pneg %p114
        %p402 = pneg %p138
        %p403 = pneg %p135
        %p404 = pneg %p159
        %p405 = pneg %p156
        %p406 = pneg %p180
        %p407 = pneg %p177
        %p408 = pneg %p201
        %p409 = pneg %p198
        %p410 = pneg %p227
        %p411 = pneg %p224
        %s412 = sand.u32 %s214, 1
        %s413 = scalar_lea.sflag [#allocation6], %s412
        %s414 = sand.u32 %s214, 1
        %s415 = scalar_lea.vmem [#allocation12], %s414
        %p416 = pneg %p253
        %p417 = pneg %p250
        %s418 = sand.u32 %s240, 1
        %s419 = scalar_lea.sflag [#allocation14], %s418
        %s420 = sand.u32 %s240, 1
        %s421 = smul.addr %s420, 16
        %s422 = scalar_lea.vmem [#allocation13], %s421
        %s423 = smul.u32 2, %s38
        %s424 = smul.u32 2, %s38
        %p426 = scmp.eq.s32.totalorder %s38, 0
        // Predicated region
        $region65: #{tpu_custom_call.1} parent=47 // pred_check
          %p427 = pneg %p426
        $region66: #{tpu_custom_call.1} parent=47 // pred_check_branch
          %429 = sbr.rel (%p427) target = $region68
        $region67: #{tpu_custom_call.1} parent=47 // pred_region
          %vm430 = vcmask 253952
          %431 = vst.msk [vmem:[#allocation2] sm:$0x1] %vm430, 0.0
          %vm432 = vcmask 64512
          %433 = vst.msk [vmem:[#allocation3] sm:$0xff] %vm432, 0.0
          %434 = vst.msk [vmem:[#allocation3 + $0x8] sm:$0xff] %vm432, 0.0
          %435 = vst.msk [vmem:[#allocation3 + $0x10] sm:$0xff] %vm432, 0.0
          %436 = vst.msk [vmem:[#allocation3 + $0x18] sm:$0xff] %vm432, 0.0
        $region68: #{tpu_custom_call.1} parent=47 // pred_fallthru
          _
        %v437 = vld [vmem:[%s364] sm:$0xf]
        %v438 = vld [vmem:[%s364 + $0x4] sm:$0xf]
        %v439 = vld [vmem:[%s373] sm:$0xf]
        %v440 = vld [vmem:[%s373 + $0x4] sm:$0xf]
        %v441 = vld [vmem:[#allocation9] sm:$0xf]
        %v442 = vld [vmem:[#allocation9 + $0x4] sm:$0xf]
        %v443 = vld [vmem:[#allocation9 + $0x8] sm:$0xf]
        %v444 = vld [vmem:[#allocation9 + $0xc] sm:$0xf]
        %v445 = vld [vmem:[%s3] sm:$0x1]
        %v447 = vlaneseq
        %v448 = vshrl.u32 %v447, 7
        %v449 = vsub.s32 0, %v448
        %v450 = vrot.slane %v445, %v449
        %v454 = vunpack.c.l.b16 %v437
        %v455 = vunpack.c.l.b16 %v438
        %v456 = vpack.c.b16 %v455, %v454
        %v461 = vunpack.c.l.b16 %v441
        %v462 = vunpack.c.l.b16 %v442
        %v463 = vunpack.c.l.b16 %v443
        %v464 = vunpack.c.l.b16 %v444
        %v465 = vpack.c.b16 %v462, %v461
        %v466 = vpack.c.b16 %v464, %v463
        %vm469 = vcmask 261120
        %v471 = vsel %vm469, %v456, 0
        %473 = vmatprep.subr.bf16.mxu0 0
        %474 = vmatpush1.bf16.msra.mxu0 %v465
        %475 = vmatprep.subr.bf16.mxu0 0
        %476 = vmatpush1.bf16.msra.mxu0 %v466
        %477 = vmatprep.subr.bf16.mxu0 0
        %478 = vmatpush1.bf16.msra.mxu0 0
        %479 = vmatprep.subr.bf16.mxu0 0
        %480 = vmatpush1.bf16.msra.mxu0 0
        %481 = vmatprep.subr.bf16.mxu0 0
        %482 = vmatpush1.bf16.msra.mxu0 0
        %483 = vmatprep.subr.bf16.mxu0 0
        %484 = vmatpush1.bf16.msra.mxu0 0
        %485 = vmatprep.subr.bf16.mxu0 0
        %486 = vmatpush1.bf16.msra.mxu0 0
        %487 = vmatprep.subr.bf16.mxu0 0
        %488 = vmatpush1.bf16.msra.mxu0 0
        %489 = vmatprep.subr.bf16.mxu0 0
        %490 = vmatpush1.bf16.msra.mxu0 0
        %491 = vmatprep.subr.bf16.mxu0 0
        %492 = vmatpush1.bf16.msra.mxu0 0
        %493 = vmatprep.subr.bf16.mxu0 0
        %494 = vmatpush1.bf16.msra.mxu0 0
        %495 = vmatprep.subr.bf16.mxu0 0
        %496 = vmatpush1.bf16.msra.mxu0 0
        %497 = vmatprep.subr.bf16.mxu0 0
        %498 = vmatpush1.bf16.msra.mxu0 0
        %499 = vmatprep.subr.bf16.mxu0 0
        %500 = vmatpush1.bf16.msra.mxu0 0
        %501 = vmatprep.subr.bf16.mxu0 0
        %502 = vmatpush1.bf16.msra.mxu0 0
        %503 = vmatprep.subr.bf16.mxu0 0
        %504 = vmatpush1.bf16.msra.mxu0 0
        %505 = vmatprep.mubr.bf16.mxu0 0
        %506 = vmatmul.mubr.bf16.gmra.mrb[0].mxu0 %v471
        %v507 = vpop.f32.mrb[0].mxu0
        %v508 = vadd.f32 %v450, %v507
        %v509 = vpop.f32.mrb[0].mxu0
        %v510 = vpop.f32.mrb[0].mxu0
        %v511 = vadd.f32 %v450, %v510
        %v512 = vpop.f32.mrb[0].mxu0
        %513 = vdwg.mxu0
        %v514 = vld [vmem:[#allocation10] sm:$0xf]
        %v515 = vld [vmem:[#allocation10 + $0x4] sm:$0xf]
        %v516 = vld [vmem:[#allocation10 + $0x8] sm:$0xf]
        %v517 = vld [vmem:[#allocation10 + $0xc] sm:$0xf]
        %v518 = vld [vmem:[%s5] sm:$0x1]
        %v520 = vlaneseq
        %v521 = vshrl.u32 %v520, 7
        %v522 = vsub.s32 0, %v521
        %v523 = vrot.slane %v518, %v522
        %v527 = vunpack.c.l.b16 %v439
        %v528 = vunpack.c.l.b16 %v440
        %v529 = vpack.c.b16 %v528, %v527
        %v534 = vunpack.c.l.b16 %v514
        %v535 = vunpack.c.l.b16 %v515
        %v536 = vunpack.c.l.b16 %v516
        %v537 = vunpack.c.l.b16 %v517
        %v538 = vpack.c.b16 %v535, %v534
        %v539 = vpack.c.b16 %v537, %v536
        %v543 = vsel %vm469, %v529, 0
        %545 = vmatprep.subr.bf16.mxu0 0
        %546 = vmatpush1.bf16.msra.mxu0 %v538
        %547 = vmatprep.subr.bf16.mxu0 0
        %548 = vmatpush1.bf16.msra.mxu0 %v539
        %549 = vmatprep.subr.bf16.mxu0 0
        %550 = vmatpush1.bf16.msra.mxu0 0
        %551 = vmatprep.subr.bf16.mxu0 0
        %552 = vmatpush1.bf16.msra.mxu0 0
        %553 = vmatprep.subr.bf16.mxu0 0
        %554 = vmatpush1.bf16.msra.mxu0 0
        %555 = vmatprep.subr.bf16.mxu0 0
        %556 = vmatpush1.bf16.msra.mxu0 0
        %557 = vmatprep.subr.bf16.mxu0 0
        %558 = vmatpush1.bf16.msra.mxu0 0
        %559 = vmatprep.subr.bf16.mxu0 0
        %560 = vmatpush1.bf16.msra.mxu0 0
        %561 = vmatprep.subr.bf16.mxu0 0
        %562 = vmatpush1.bf16.msra.mxu0 0
        %563 = vmatprep.subr.bf16.mxu0 0
        %564 = vmatpush1.bf16.msra.mxu0 0
        %565 = vmatprep.subr.bf16.mxu0 0
        %566 = vmatpush1.bf16.msra.mxu0 0
        %567 = vmatprep.subr.bf16.mxu0 0
        %568 = vmatpush1.bf16.msra.mxu0 0
        %569 = vmatprep.subr.bf16.mxu0 0
        %570 = vmatpush1.bf16.msra.mxu0 0
        %571 = vmatprep.subr.bf16.mxu0 0
        %572 = vmatpush1.bf16.msra.mxu0 0
        %573 = vmatprep.subr.bf16.mxu0 0
        %574 = vmatpush1.bf16.msra.mxu0 0
        %575 = vmatprep.subr.bf16.mxu0 0
        %576 = vmatpush1.bf16.msra.mxu0 0
        %577 = vmatprep.mubr.bf16.mxu0 0
        %578 = vmatmul.mubr.bf16.gmra.mrb[0].mxu0 %v543
        %v579 = vpop.f32.mrb[0].mxu0
        %v580 = vadd.f32 %v523, %v579
        %v581 = vpop.f32.mrb[0].mxu0
        %v582 = vpop.f32.mrb[0].mxu0
        %v583 = vadd.f32 %v523, %v582
        %v584 = vpop.f32.mrb[0].mxu0
        %585 = vdwg.mxu0
        %vm586 = vcmp.gt.f32.partialorder %v508, 0.0
        %vm587 = vcmp.gt.f32.partialorder %v511, 0.0
        %v588 = vadd.f32 %v508, 1.0
        %v589 = vadd.f32 %v511, 1.0
        %v590 = vmin.f32 %v508, 0.0
        %v591 = vmin.f32 %v511, 0.0
        %v592 = vmul.f32 %v590, 1.442695
        %v593 = vpow.pop %v592
        %v594 = vmul.f32 %v591, 1.442695
        %v595 = vpow.pop %v594
        %v596 = vsel %vm586, %v588, %v593
        %v597 = vsel %vm587, %v589, %v595
        %s598 = smul.u32 %s38, 16
        %v599 = vlaneseq
        %v600 = vshrl.u32 %v599, 7
        %v601 = vadd.s32 %v600, 8
        %v602 = vstv %s598
        %v603 = vadd.s32 %v602, %v600
        %v604 = vadd.s32 %v602, %v601
        %vm605 = vcmp.lt.s32.totalorder %v603, 24
        %vm606 = vcmp.lt.s32.totalorder %v604, 24
        %v607 = vsel %vm605, %v596, 0.0
        %v608 = vsel %vm606, %v597, 0.0
        %v609 = vld [vmem:[#allocation2] sm:$0x1]
        %v610 = vsel %vm469, %v607, 0.0
        %v611 = vsel %vm469, %v608, 0.0
        %v612 = vadd.f32 %v610, %v611
        %v613 = vrot.slane %v612, 4
        %v614 = vadd.f32 %v612, %v613
        %v615 = vrot.slane %v614, 2
        %v616 = vadd.f32 %v614, %v615
        %v617 = vrot.slane %v616, 1
        %v618 = vadd.f32 %v616, %v617
        %v619 = vadd.f32 %v609, %v618
        %vm620 = vcmask 253952
        %621 = vst.msk [vmem:[#allocation2] sm:$0x1] %vm620, %v619
        %v622 = vpack.c.bf16 %v608, %v607
        %v623 = vpack.c.bf16 %v583, %v580
        %624 = vxpose.xlu0.c.b16.start [1/8] %v622, 128
        %625 = vxpose.xlu0.c.b16.cont [2/8] 0, 128
        %626 = vxpose.xlu0.c.b16.cont [3/8] 0, 128
        %627 = vxpose.xlu0.c.b16.cont [4/8] 0, 128
        %628 = vxpose.xlu0.c.b16.cont [5/8] 0, 128
        %629 = vxpose.xlu0.c.b16.cont [6/8] 0, 128
        %630 = vxpose.xlu0.c.b16.cont [7/8] 0, 128
        %631 = vxpose.xlu0.c.b16.end [8/8] 0, 128
        %v632 = vpop.trf.xlu0
        %v633 = vpop.trf.xlu0
        %v634 = vpop.trf.xlu0
        %v635 = vpop.trf.xlu0
        %v636 = vpop.trf.xlu0
        %v637 = vpop.trf.xlu0
        %v638 = vpop.trf.xlu0
        %v639 = vpop.trf.xlu0
        %vm640 = vcmask 130048
        %v642 = vsel %vm640, %v632, 0
        %v645 = vsel %vm640, %v633, 0
        %647 = vmatprep.subr.bf16.mxu0 0
        %648 = vmatpush1.bf16.msra.mxu0 %v623
        %649 = vmatprep.subr.bf16.mxu0 0
        %650 = vmatpush1.bf16.msra.mxu0 0
        %651 = vmatprep.subr.bf16.mxu0 0
        %652 = vmatpush1.bf16.msra.mxu0 0
        %653 = vmatprep.subr.bf16.mxu0 0
        %654 = vmatpush1.bf16.msra.mxu0 0
        %655 = vmatprep.subr.bf16.mxu0 0
        %656 = vmatpush1.bf16.msra.mxu0 0
        %657 = vmatprep.subr.bf16.mxu0 0
        %658 = vmatpush1.bf16.msra.mxu0 0
        %659 = vmatprep.subr.bf16.mxu0 0
        %660 = vmatpush1.bf16.msra.mxu0 0
        %661 = vmatprep.subr.bf16.mxu0 0
        %662 = vmatpush1.bf16.msra.mxu0 0
        %663 = vmatprep.subr.bf16.mxu0 0
        %664 = vmatpush1.bf16.msra.mxu0 0
        %665 = vmatprep.subr.bf16.mxu0 0
        %666 = vmatpush1.bf16.msra.mxu0 0
        %667 = vmatprep.subr.bf16.mxu0 0
        %668 = vmatpush1.bf16.msra.mxu0 0
        %669 = vmatprep.subr.bf16.mxu0 0
        %670 = vmatpush1.bf16.msra.mxu0 0
        %671 = vmatprep.subr.bf16.mxu0 0
        %672 = vmatpush1.bf16.msra.mxu0 0
        %673 = vmatprep.subr.bf16.mxu0 0
        %674 = vmatpush1.bf16.msra.mxu0 0
        %675 = vmatprep.subr.bf16.mxu0 0
        %676 = vmatpush1.bf16.msra.mxu0 0
        %677 = vmatprep.subr.bf16.mxu0 0
        %678 = vmatpush1.bf16.msra.mxu0 0
        %679 = vmatprep.mubr.bf16.mxu0 0
        %680 = vmatmul.mubr.bf16.gmra.mrb[0].mxu0 %v642
        %v681 = vpop.f32.mrb[0].mxu0
        %v682 = vadd.f32 0.0, %v681
        %v683 = vpop.f32.mrb[0].mxu0
        %v684 = vpop.f32.mrb[0].mxu0
        %v685 = vadd.f32 0.0, %v684
        %v686 = vpop.f32.mrb[0].mxu0
        %687 = vmatprep.mubr.bf16.mxu0 0
        %688 = vmatmul.mubr.bf16.gmra.mrb[0].mxu0 %v645
        %v689 = vpop.f32.mrb[0].mxu0
        %v690 = vadd.f32 0.0, %v689
        %v691 = vpop.f32.mrb[0].mxu0
        %v692 = vpop.f32.mrb[0].mxu0
        %v693 = vadd.f32 0.0, %v692
        %v694 = vpop.f32.mrb[0].mxu0
        %695 = vdwg.mxu0
        %v696 = vld [vmem:[#allocation3] sm:$0xff]
        %v697 = vadd.f32 %v696, %v682
        %vm698 = vcmask 64512
        %699 = vst.msk [vmem:[#allocation3] sm:$0xff] %vm698, %v697
        %v700 = vld [vmem:[#allocation3 + $0x8] sm:$0xff]
        %702 = vrot.lane.b32.xlu0 %v685, 120
        %v703 = vpop.permute.xlu0 %702
        %v705 = vadd.f32 %v700, %v703
        %706 = vst.msk [vmem:[#allocation3 + $0x8] sm:$0xff] %vm698, %v705
        %v707 = vld [vmem:[#allocation3 + $0x10] sm:$0xff]
        %709 = vrot.lane.b32.xlu0 %v690, 112
        %v710 = vpop.permute.xlu0 %709
        %v712 = vadd.f32 %v707, %v710
        %713 = vst.msk [vmem:[#allocation3 + $0x10] sm:$0xff] %vm698, %v712
        %v714 = vld [vmem:[#allocation3 + $0x18] sm:$0xff]
        %716 = vrot.lane.b32.xlu0 %v693, 104
        %v717 = vpop.permute.xlu0 %716
        %v719 = vadd.f32 %v714, %v717
        %720 = vst.msk [vmem:[#allocation3 + $0x18] sm:$0xff] %vm698, %v719
        %p721 = scmp.eq.s32.totalorder %s38, 1
        // Predicated region
        $region69: #{tpu_custom_call.1} parent=47 // pred_check
          %p722 = pneg %p721
        $region70: #{tpu_custom_call.1} parent=47 // pred_check_branch
          %724 = sbr.rel (%p722) target = $region72
        $region71: #{tpu_custom_call.1} parent=47 // pred_region
          %v725 = vld [vmem:[#allocation3] sm:$0xff]
          %v726 = vld [vmem:[#allocation3 + $0x8] sm:$0xff]
          %v727 = vld [vmem:[#allocation3 + $0x10] sm:$0xff]
          %v728 = vld [vmem:[#allocation3 + $0x18] sm:$0xff]
          %v729 = vpack.c.bf16 %v726, %v725
          %v730 = vpack.c.bf16 %v728, %v727
          %v731 = vld [vmem:[%s6] sm:$0xf]
          %v733 = vsel %vm698, %v729, 0
          %vm735 = vcmask 1043456
          %v737 = vsel %vm735, %v731, 0
          %739 = vmatprep.subr.bf16.mxu0 0
          %740 = vmatpush1.bf16.msra.mxu0 %v737
          %741 = vmatprep.subr.bf16.mxu0 0
          %742 = vmatpush1.bf16.msra.mxu0 0
          %743 = vmatprep.subr.bf16.mxu0 0
          %744 = vmatpush1.bf16.msra.mxu0 0
          %745 = vmatprep.subr.bf16.mxu0 0
          %746 = vmatpush1.bf16.msra.mxu0 0
          %747 = vmatprep.subr.bf16.mxu0 0
          %748 = vmatpush1.bf16.msra.mxu0 0
          %749 = vmatprep.subr.bf16.mxu0 0
          %750 = vmatpush1.bf16.msra.mxu0 0
          %751 = vmatprep.subr.bf16.mxu0 0
          %752 = vmatpush1.bf16.msra.mxu0 0
          %753 = vmatprep.subr.bf16.mxu0 0
          %754 = vmatpush1.bf16.msra.mxu0 0
          %755 = vmatprep.subr.bf16.mxu0 0
          %756 = vmatpush1.bf16.msra.mxu0 0
          %757 = vmatprep.subr.bf16.mxu0 0
          %758 = vmatpush1.bf16.msra.mxu0 0
          %759 = vmatprep.subr.bf16.mxu0 0
          %760 = vmatpush1.bf16.msra.mxu0 0
          %761 = vmatprep.subr.bf16.mxu0 0
          %762 = vmatpush1.bf16.msra.mxu0 0
          %763 = vmatprep.subr.bf16.mxu0 0
          %764 = vmatpush1.bf16.msra.mxu0 0
          %765 = vmatprep.subr.bf16.mxu0 0
          %766 = vmatpush1.bf16.msra.mxu0 0
          %767 = vmatprep.subr.bf16.mxu0 0
          %768 = vmatpush1.bf16.msra.mxu0 0
          %769 = vmatprep.subr.bf16.mxu0 0
          %770 = vmatpush1.bf16.msra.mxu0 0
          %771 = vmatprep.mubr.bf16.mxu0 0
          %772 = vmatmul.mubr.bf16.gmra.mrb[0].mxu0 %v733
          %v773 = vpop.f32.mrb[0].mxu0
          %v774 = vadd.f32 0.0, %v773
          %v775 = vpop.f32.mrb[0].mxu0
          %v776 = vpop.f32.mrb[0].mxu0
          %v777 = vpop.f32.mrb[0].mxu0
          %778 = vdwg.mxu0
          %v779 = vpack.c.bf16 %v774, %v774
          %vm780 = vcmask 257024
          %781 = vst.msk [vmem:[%s422] sm:$0xf] %vm780, %v779
          %v782 = vld [vmem:[%s6 + $0x4] sm:$0xf]
          %v784 = vrot.slane %v729, 4
          %v786 = vsel %vm698, %v784, 0
          %v789 = vsel %vm735, %v782, 0
          %791 = vmatprep.subr.bf16.mxu0 0
          %792 = vmatpush1.bf16.msra.mxu0 %v789
          %793 = vmatprep.subr.bf16.mxu0 0
          %794 = vmatpush1.bf16.msra.mxu0 0
          %795 = vmatprep.subr.bf16.mxu0 0
          %796 = vmatpush1.bf16.msra.mxu0 0
          %797 = vmatprep.subr.bf16.mxu0 0
          %798 = vmatpush1.bf16.msra.mxu0 0
          %799 = vmatprep.subr.bf16.mxu0 0
          %800 = vmatpush1.bf16.msra.mxu0 0
          %801 = vmatprep.subr.bf16.mxu0 0
          %802 = vmatpush1.bf16.msra.mxu0 0
          %803 = vmatprep.subr.bf16.mxu0 0
          %804 = vmatpush1.bf16.msra.mxu0 0
          %805 = vmatprep.subr.bf16.mxu0 0
          %806 = vmatpush1.bf16.msra.mxu0 0
          %807 = vmatprep.subr.bf16.mxu0 0
          %808 = vmatpush1.bf16.msra.mxu0 0
          %809 = vmatprep.subr.bf16.mxu0 0
          %810 = vmatpush1.bf16.msra.mxu0 0
          %811 = vmatprep.subr.bf16.mxu0 0
          %812 = vmatpush1.bf16.msra.mxu0 0
          %813 = vmatprep.subr.bf16.mxu0 0
          %814 = vmatpush1.bf16.msra.mxu0 0
          %815 = vmatprep.subr.bf16.mxu0 0
          %816 = vmatpush1.bf16.msra.mxu0 0
          %817 = vmatprep.subr.bf16.mxu0 0
          %818 = vmatpush1.bf16.msra.mxu0 0
          %819 = vmatprep.subr.bf16.mxu0 0
          %820 = vmatpush1.bf16.msra.mxu0 0
          %821 = vmatprep.subr.bf16.mxu0 0
          %822 = vmatpush1.bf16.msra.mxu0 0
          %823 = vmatprep.mubr.bf16.mxu0 0
          %824 = vmatmul.mubr.bf16.gmra.mrb[0].mxu0 %v786
          %v825 = vpop.f32.mrb[0].mxu0
          %v826 = vadd.f32 0.0, %v825
          %v827 = vpop.f32.mrb[0].mxu0
          %v828 = vpop.f32.mrb[0].mxu0
          %v829 = vpop.f32.mrb[0].mxu0
          %830 = vdwg.mxu0
          %v831 = vpack.c.bf16 %v826, %v826
          %832 = vst.msk [vmem:[%s422 + $0x4] sm:$0xf] %vm780, %v831
          %v833 = vld [vmem:[%s6 + $0x8] sm:$0xf]
          %v835 = vsel %vm698, %v730, 0
          %v838 = vsel %vm735, %v833, 0
          %840 = vmatprep.subr.bf16.mxu0 0
          %841 = vmatpush1.bf16.msra.mxu0 %v838
          %842 = vmatprep.subr.bf16.mxu0 0
          %843 = vmatpush1.bf16.msra.mxu0 0
          %844 = vmatprep.subr.bf16.mxu0 0
          %845 = vmatpush1.bf16.msra.mxu0 0
          %846 = vmatprep.subr.bf16.mxu0 0
          %847 = vmatpush1.bf16.msra.mxu0 0
          %848 = vmatprep.subr.bf16.mxu0 0
          %849 = vmatpush1.bf16.msra.mxu0 0
          %850 = vmatprep.subr.bf16.mxu0 0
          %851 = vmatpush1.bf16.msra.mxu0 0
          %852 = vmatprep.subr.bf16.mxu0 0
          %853 = vmatpush1.bf16.msra.mxu0 0
          %854 = vmatprep.subr.bf16.mxu0 0
          %855 = vmatpush1.bf16.msra.mxu0 0
          %856 = vmatprep.subr.bf16.mxu0 0
          %857 = vmatpush1.bf16.msra.mxu0 0
          %858 = vmatprep.subr.bf16.mxu0 0
          %859 = vmatpush1.bf16.msra.mxu0 0
          %860 = vmatprep.subr.bf16.mxu0 0
          %861 = vmatpush1.bf16.msra.mxu0 0
          %862 = vmatprep.subr.bf16.mxu0 0
          %863 = vmatpush1.bf16.msra.mxu0 0
          %864 = vmatprep.subr.bf16.mxu0 0
          %865 = vmatpush1.bf16.msra.mxu0 0
          %866 = vmatprep.subr.bf16.mxu0 0
          %867 = vmatpush1.bf16.msra.mxu0 0
          %868 = vmatprep.subr.bf16.mxu0 0
          %869 = vmatpush1.bf16.msra.mxu0 0
          %870 = vmatprep.subr.bf16.mxu0 0
          %871 = vmatpush1.bf16.msra.mxu0 0
          %872 = vmatprep.mubr.bf16.mxu0 0
          %873 = vmatmul.mubr.bf16.gmra.mrb[0].mxu0 %v835
          %v874 = vpop.f32.mrb[0].mxu0
          %v875 = vadd.f32 0.0, %v874
          %v876 = vpop.f32.mrb[0].mxu0
          %v877 = vpop.f32.mrb[0].mxu0
          %v878 = vpop.f32.mrb[0].mxu0
          %879 = vdwg.mxu0
          %v880 = vpack.c.bf16 %v875, %v875
          %881 = vst.msk [vmem:[%s422 + $0x8] sm:$0xf] %vm780, %v880
          %v882 = vld [vmem:[%s6 + $0xc] sm:$0xf]
          %v884 = vrot.slane %v730, 4
          %v886 = vsel %vm698, %v884, 0
          %v889 = vsel %vm735, %v882, 0
          %891 = vmatprep.subr.bf16.mxu0 0
          %892 = vmatpush1.bf16.msra.mxu0 %v889
          %893 = vmatprep.subr.bf16.mxu0 0
          %894 = vmatpush1.bf16.msra.mxu0 0
          %895 = vmatprep.subr.bf16.mxu0 0
          %896 = vmatpush1.bf16.msra.mxu0 0
          %897 = vmatprep.subr.bf16.mxu0 0
          %898 = vmatpush1.bf16.msra.mxu0 0
          %899 = vmatprep.subr.bf16.mxu0 0
          %900 = vmatpush1.bf16.msra.mxu0 0
          %901 = vmatprep.subr.bf16.mxu0 0
          %902 = vmatpush1.bf16.msra.mxu0 0
          %903 = vmatprep.subr.bf16.mxu0 0
          %904 = vmatpush1.bf16.msra.mxu0 0
          %905 = vmatprep.subr.bf16.mxu0 0
          %906 = vmatpush1.bf16.msra.mxu0 0
          %907 = vmatprep.subr.bf16.mxu0 0
          %908 = vmatpush1.bf16.msra.mxu0 0
          %909 = vmatprep.subr.bf16.mxu0 0
          %910 = vmatpush1.bf16.msra.mxu0 0
          %911 = vmatprep.subr.bf16.mxu0 0
          %912 = vmatpush1.bf16.msra.mxu0 0
          %913 = vmatprep.subr.bf16.mxu0 0
          %914 = vmatpush1.bf16.msra.mxu0 0
          %915 = vmatprep.subr.bf16.mxu0 0
          %916 = vmatpush1.bf16.msra.mxu0 0
          %917 = vmatprep.subr.bf16.mxu0 0
          %918 = vmatpush1.bf16.msra.mxu0 0
          %919 = vmatprep.subr.bf16.mxu0 0
          %920 = vmatpush1.bf16.msra.mxu0 0
          %921 = vmatprep.subr.bf16.mxu0 0
          %922 = vmatpush1.bf16.msra.mxu0 0
          %923 = vmatprep.mubr.bf16.mxu0 0
          %924 = vmatmul.mubr.bf16.gmra.mrb[0].mxu0 %v886
          %v925 = vpop.f32.mrb[0].mxu0
          %v926 = vadd.f32 0.0, %v925
          %v927 = vpop.f32.mrb[0].mxu0
          %v928 = vpop.f32.mrb[0].mxu0
          %v929 = vpop.f32.mrb[0].mxu0
          %930 = vdwg.mxu0
          %v931 = vpack.c.bf16 %v926, %v926
          %932 = vst.msk [vmem:[%s422 + $0xc] sm:$0xf] %vm780, %v931
          %v933 = vld [vmem:[#allocation2] sm:$0x1]
          %934 = vst.msk [vmem:[%s415] sm:$0x1] %vm620, %v933
        $region72: #{tpu_custom_call.1} parent=47 // pred_fallthru
          _
        %s935 = sand.u32 %s214, 1
        %s936 = scalar_lea.sflag [#allocation6], %s935
        %s937 = sand.u32 %s214, 1
        %s938 = scalar_lea.vmem [#allocation12], %s937
        %s939 = sand.u32 %s240, 1
        %s940 = scalar_lea.sflag [#allocation14], %s939
        %s941 = sand.u32 %s240, 1
        %s942 = smul.addr %s941, 16
        %s943 = scalar_lea.vmem [#allocation13], %s942
        // Predicated region
        $region73: #{tpu_custom_call.1} parent=47 // pred_check
          %p944 = pneg %p224
        $region74: #{tpu_custom_call.1} parent=47 // pred_check_branch
          %946 = sbr.rel (%p944) target = $region76
        $region75: #{tpu_custom_call.1} parent=47 // pred_region
          %s948 = ssub.s32 16, 16
          %949 = vsyncadd %s936, %s948
          %s950 = smul.addr %s37, 16
          %s951 = scalar_lea.hbm %s7, %s950
          %s953 = sshll.u32 %s938, 4
          %s954 = int_to_ptr.vmem [resolvable:$true] %s953
          %956 = dma.vmem_to_hbm [thread:$0]  %s954, 16, %s951, %s936
        $region76: #{tpu_custom_call.1} parent=47 // pred_fallthru
          _
        // Predicated region
        $region77: #{tpu_custom_call.1} parent=47 // pred_check
          %p957 = pneg %p250
        $region78: #{tpu_custom_call.1} parent=47 // pred_check_branch
          %959 = sbr.rel (%p957) target = $region80
        $region79: #{tpu_custom_call.1} parent=47 // pred_region
          %s961 = ssub.s32 256, 256
          %962 = vsyncadd %s940, %s961
          %s963 = smul.addr %s37, 4
          %s964 = smul.addr %s963, 64
          %s965 = scalar_lea.hbm %s8, %s964
          %s966 = sshll.u32 %s943, 4
          %s967 = int_to_ptr.vmem [resolvable:$true] %s966
          %972 = dma.vmem_to_hbm [thread:$0]  %s967, 256, %s965, %s940, 64, 64, 4
        $region80: #{tpu_custom_call.1} parent=47 // pred_fallthru
          _
      $region48: #{tpu_custom_call.1} parent=5 // pred_fallthru
        _
      %p973 = scmp.le.s32.totalorder 2, %s28
      // Predicated region
      $region81: #{tpu_custom_call.1} parent=5 // pred_check
        %p974 = pneg %p973
      $region82: #{tpu_custom_call.1} parent=5 // pred_check_branch
        %976 = sbr.rel (%p974) target = $region84
      $region83: #{tpu_custom_call.1} parent=5 // pred_region
        %s977 = ssub.s32 %s28, 2
        // Predicated region
        $region85: #{tpu_custom_call.1} parent=83 // pred_check
          %p978 = pneg %p230
        $region86: #{tpu_custom_call.1} parent=83 // pred_check_branch
          %980 = sbr.rel (%p978) target = $region88
        $region87: #{tpu_custom_call.1} parent=83 // pred_region
          %s981 = sand.u32 %s215, 1
          %s982 = scalar_lea.sflag [#allocation6], %s981
          %s983 = sand.u32 %s215, 1
          %s984 = scalar_lea.vmem [#allocation12], %s983
          %985 = dma.done %s982, 16
        $region88: #{tpu_custom_call.1} parent=83 // pred_fallthru
          _
        // Predicated region
        $region89: #{tpu_custom_call.1} parent=83 // pred_check
          %p986 = pneg %p256
        $region90: #{tpu_custom_call.1} parent=83 // pred_check_branch
          %988 = sbr.rel (%p986) target = $region92
        $region91: #{tpu_custom_call.1} parent=83 // pred_region
          %s989 = sand.u32 %s241, 1
          %s990 = scalar_lea.sflag [#allocation14], %s989
          %s991 = sand.u32 %s241, 1
          %s992 = smul.addr %s991, 16
          %s993 = scalar_lea.vmem [#allocation13], %s992
          %994 = dma.done %s990, 256
        $region92: #{tpu_custom_call.1} parent=83 // pred_fallthru
          _
      $region84: #{tpu_custom_call.1} parent=5 // pred_fallthru
        _
    $region6: #{tpu_custom_call.1} parent=1 // loop_footer
      %s32 = sadd.s32 1, %s28
    $region7: #{tpu_custom_call.1} parent=1 // loop_footer_branch
      %27 = sbr.rel target = $region3
    $region8: #{tpu_custom_call.1} parent=1 // loop_exit
      _
    %995 = vsyncpa [#allocation5], 1
    %s996 = scalar_lea.sflag [#allocation5], 1
    %997 = vsyncpa %s996, 1
    %998 = vsyncpa [#allocation8], 1
    %s999 = scalar_lea.sflag [#allocation8], 1
    %1000 = vsyncpa %s999, 1
    %1001 = vsyncpa [#allocation11], 1
    %1002 = vsyncpa [#allocation6], 1
    %s1003 = scalar_lea.sflag [#allocation6], 1
    %1004 = vsyncpa %s1003, 1
    %1005 = vsyncpa [#allocation14], 1
    %s1006 = scalar_lea.sflag [#allocation14], 1
    %1007 = vsyncpa %s1006, 1

</llo_original>
